<compile_context>
chip_gen: v7x
topology: tpu7x:2x2x1
jax: 0.10.0
libtpu: 0.0.40
codegen_flags: <defaults>
</compile_context>

<pallas_src>
import jax
import jax.numpy as jnp
from jax.experimental import pallas as pl
from jax.experimental.pallas import tpu as pltpu

_SQRT_2_OVER_PI = 0.7978845608028654


def _gelu_tanh(x):
    # tanh-approx GELU (== jax.nn.gelu(approximate=True)).  PyTorch nn.GELU()
    # default is erf-based; the two differ by < ~3e-4 on typical activations.
    return 0.5 * x * (1.0 + jnp.tanh(_SQRT_2_OVER_PI * (x + 0.044715 * x * x * x)))


# --------------------------------------------------------------------------
# Fused MLP kernel:  o = gelu(x @ W1 + b1) @ W2 + b2   for one row tile.
# --------------------------------------------------------------------------
def _mlp_kernel(x_ref, w1_ref, b1_ref, w2_ref, b2_ref, o_ref):
    # x: (tm, Din) bf16   w1: (Din, H) bf16   b1: (1, H) f32
    # w2: (H, Dout) bf16  b2: (1, Dout) f32   o: (tm, Dout) x.dtype
    h = jnp.dot(x_ref[...], w1_ref[...], preferred_element_type=jnp.float32)
    h = _gelu_tanh(h + b1_ref[...])
    # bf16 hidden: halves vreg/VMEM pressure of the (tm, H) activation and
    # keeps the 2nd matmul on the single-pass bf16 MXU path (f32 accumulate).
    h = h.astype(jnp.bfloat16)
    # TODO(synk): nn.Dropout(drop=0.0) is identity (inference); training-mode
    # dropout would need pltpu.prng_seed + pltpu.prng_random_bits masking.
    y = jnp.dot(h, w2_ref[...], preferred_element_type=jnp.float32)
    o_ref[...] = (y + b2_ref[...]).astype(o_ref.dtype)


def _round_up(n, m):
    return ((n + m - 1) // m) * m


# --------------------------------------------------------------------------
# Wrapper reproducing Mlp.forward
# --------------------------------------------------------------------------
def mlp_forward(x, params, *, tile_m=512):
    """x: (..., in_dim) -> (..., out_dim).  bf16 compute, f32 accumulate."""
    w1, b1, w2, b2 = params["w1"], params["b1"], params["w2"], params["b2"]
    in_dim, hid_dim = w1.shape
    out_dim = w2.shape[1]

    lead = x.shape[:-1]
    x2 = x.reshape(-1, in_dim)
    M = x2.shape[0]

    # Row tile: multiple of 8 sublanes; capped so the parallel grid keeps
    # >= 2 steps (dual-TC v7x), while big enough to amortize per-step
    # overhead on single-TC v5e/v6e.  Ragged M: last block is partial
    # (masked stores), no wrapper-side padding / slicing round trips.
    tm = min(tile_m, _round_up(M, 8))
    if M > 8:
        tm = min(tm, _round_up((M + 1) // 2, 8))
    grid = pl.cdiv(M, tm)

    # One-time dtype casts outside the grid loop.
    x_bf = x2.astype(jnp.bfloat16)
    w1_bf = w1.astype(jnp.bfloat16)
    w2_bf = w2.astype(jnp.bfloat16)
    b1_2d = b1.reshape(1, hid_dim).astype(jnp.float32)
    b2_2d = b2.reshape(1, out_dim).astype(jnp.float32)

    out_itemsize = jnp.dtype(x.dtype).itemsize
    flops = 2 * M * (in_dim * hid_dim + hid_dim * out_dim)
    bytes_accessed = (
        M * in_dim * 2                                   # x (bf16)
        + (in_dim * hid_dim + hid_dim * out_dim) * 2     # weights (bf16)
        + (hid_dim + out_dim) * 4                        # biases (f32)
        + M * out_dim * out_itemsize)                    # output
    cost = pl.CostEstimate(flops=flops, transcendentals=M * hid_dim,
                           bytes_accessed=bytes_accessed)

    # Explicit VMEM budget: double-buffered x/out tiles + resident bf16
    # weights + f32 hidden, with headroom; clamped well under v7x's 64 MiB.
    vmem_est = (2 * tm * in_dim * 2
                + 2 * tm * out_dim * out_itemsize
                + 2 * (in_dim * hid_dim + hid_dim * out_dim) * 2
                + tm * hid_dim * 4
                + (hid_dim + out_dim) * 4)
    vmem_limit = int(min(48 << 20, max(16 << 20, 2 * vmem_est)))

    out = pl.pallas_call(
        _mlp_kernel,
        out_shape=jax.ShapeDtypeStruct((M, out_dim), x.dtype),
        grid=(grid,),
        in_specs=[
            pl.BlockSpec((tm, in_dim), lambda i: (i, 0)),
            # Constant index_map -> weights/biases stay resident in VMEM.
            # NOTE: for transformer-sized dims on v7x (64 MiB VMEM), switch
            # these to pipeline_mode=pl.Buffered(1) or add a trailing
            # "arbitrary" grid axis over hid_dim with an f32 accumulator.
            pl.BlockSpec((in_dim, hid_dim), lambda i: (0, 0)),
            pl.BlockSpec((1, hid_dim), lambda i: (0, 0)),
            pl.BlockSpec((hid_dim, out_dim), lambda i: (0, 0)),
            pl.BlockSpec((1, out_dim), lambda i: (0, 0)),
        ],
        out_specs=pl.BlockSpec((tm, out_dim), lambda i: (i, 0)),
        compiler_params=pltpu.CompilerParams(
            dimension_semantics=("parallel",),
            vmem_limit_bytes=vmem_limit),
        cost_estimate=cost,
    )(x_bf, w1_bf, b1_2d, w2_bf, b2_2d)

    return out.reshape(lead + (out_dim,))


# --------------------------------------------------------------------------
# Pure-JAX f32 reference (module semantics; kernel is bf16-level accuracy)
# --------------------------------------------------------------------------
def mlp_reference(x, params):
    h = _gelu_tanh(jnp.dot(x, params["w1"]) + params["b1"])
    return jnp.dot(h, params["w2"]) + params["b2"]


# --------------------------------------------------------------------------
# Demo
# --------------------------------------------------------------------------
if __name__ == "__main__":
    key = jax.random.PRNGKey(0)
    batch, seq = 2, 256
    in_dim, hid_dim, out_dim = 128, 256, 128     # lane-dense feature dims

    k_x, k_w1, k_b1, k_w2, k_b2 = jax.random.split(key, 5)
    x = jax.random.normal(k_x, (batch, seq, in_dim), dtype=jnp.float32)

    params = {
        "w1": 0.05 * jax.random.normal(k_w1, (in_dim, hid_dim), jnp.float32),
        "b1": 0.05 * jax.random.normal(k_b1, (hid_dim,), jnp.float32),
        "w2": 0.05 * jax.random.normal(k_w2, (hid_dim, out_dim), jnp.float32),
        "b2": 0.05 * jax.random.normal(k_b2, (out_dim,), jnp.float32),
    }

    out = mlp_forward(x, params)
    out = jax.block_until_ready(out)

    ref = mlp_reference(x, params)
    assert out.shape == (batch, seq, out_dim), out.shape
    # bf16-MXU accuracy vs f32 reference.
    assert jnp.allclose(out, ref, atol=3e-2, rtol=3e-2), \
        float(jnp.max(jnp.abs(out - ref)))

    print("KERNEL_OK")
</pallas_src>

<mosaic_0001>
module attributes {stable_mosaic.version = 11 : i64} {
  func.func @_mlp_kernel(%arg0: i32, %arg1: memref<256x128xbf16, #tpu.memory_space<vmem>>, %arg2: memref<128x256xbf16, #tpu.memory_space<vmem>>, %arg3: memref<1x256xf32, #tpu.memory_space<vmem>>, %arg4: memref<256x128xbf16, #tpu.memory_space<vmem>>, %arg5: memref<1x128xf32, #tpu.memory_space<vmem>>, %arg6: memref<256x128xf32, #tpu.memory_space<vmem>>) attributes {dimension_semantics = [#tpu.dimension_semantics<parallel>], iteration_bounds = array<i64: 2>, scalar_prefetch = 0 : i64, scratch_operands = 0 : i64, tpu.core_type = #tpu.core_type<tc>, window_params = [{transform_indices = @transform_0, window_bounds = array<i64: 256, 128>}, {pipeline_mode = #tpu.pipeline_mode<synchronous>, transform_indices = @transform_1, window_bounds = array<i64: 128, 256>}, {pipeline_mode = #tpu.pipeline_mode<synchronous>, transform_indices = @transform_2, window_bounds = array<i64: 1, 256>}, {pipeline_mode = #tpu.pipeline_mode<synchronous>, transform_indices = @transform_3, window_bounds = array<i64: 256, 128>}, {pipeline_mode = #tpu.pipeline_mode<synchronous>, transform_indices = @transform_4, window_bounds = array<i64: 1, 128>}, {transform_indices = @transform_5, window_bounds = array<i64: 256, 128>}]} {
    %c0 = arith.constant 0 : index
    %c0_0 = arith.constant 0 : index
    %0 = vector.load %arg1[%c0, %c0_0] : memref<256x128xbf16, #tpu.memory_space<vmem>>, vector<256x128xbf16>
    %c0_1 = arith.constant 0 : index
    %c0_2 = arith.constant 0 : index
    %1 = vector.load %arg2[%c0_1, %c0_2] : memref<128x256xbf16, #tpu.memory_space<vmem>>, vector<128x256xbf16>
    %cst = arith.constant dense<0.000000e+00> : vector<256x256xf32>
    %2 = tpu.matmul %0, %1, %cst {dimension_numbers = #tpu.dot_dimension_numbers<[1], [0], [0], [1], [0, 0, 1, 1], [], []>} : vector<256x128xbf16>, vector<128x256xbf16>, vector<256x256xf32> -> vector<256x256xf32>
    %c0_3 = arith.constant 0 : index
    %c0_4 = arith.constant 0 : index
    %3 = vector.load %arg3[%c0_3, %c0_4] : memref<1x256xf32, #tpu.memory_space<vmem>>, vector<1x256xf32>
    %4 = vector.broadcast %3 : vector<1x256xf32> to vector<256x256xf32>
    %5 = arith.addf %2, %4 : vector<256x256xf32>
    %cst_5 = arith.constant 5.000000e-01 : f32
    %6 = vector.broadcast %cst_5 : f32 to vector<256x256xf32>
    %7 = arith.mulf %6, %5 : vector<256x256xf32>
    %cst_6 = arith.constant 4.471500e-02 : f32
    %8 = vector.broadcast %cst_6 : f32 to vector<256x256xf32>
    %9 = arith.mulf %8, %5 : vector<256x256xf32>
    %10 = arith.mulf %9, %5 : vector<256x256xf32>
    %11 = arith.mulf %10, %5 : vector<256x256xf32>
    %12 = arith.addf %5, %11 : vector<256x256xf32>
    %cst_7 = arith.constant 0.797884583 : f32
    %13 = vector.broadcast %cst_7 : f32 to vector<256x256xf32>
    %14 = arith.mulf %13, %12 : vector<256x256xf32>
    %15 = math.tanh %14 : vector<256x256xf32>
    %cst_8 = arith.constant 1.000000e+00 : f32
    %16 = vector.broadcast %cst_8 : f32 to vector<256x256xf32>
    %17 = arith.addf %16, %15 : vector<256x256xf32>
    %18 = arith.mulf %7, %17 : vector<256x256xf32>
    %19 = arith.truncf %18 : vector<256x256xf32> to vector<256x256xbf16>
    %c0_9 = arith.constant 0 : index
    %c0_10 = arith.constant 0 : index
    %20 = vector.load %arg4[%c0_9, %c0_10] : memref<256x128xbf16, #tpu.memory_space<vmem>>, vector<256x128xbf16>
    %cst_11 = arith.constant dense<0.000000e+00> : vector<256x128xf32>
    %21 = tpu.matmul %19, %20, %cst_11 {dimension_numbers = #tpu.dot_dimension_numbers<[1], [0], [0], [1], [0, 0, 1, 1], [], []>} : vector<256x256xbf16>, vector<256x128xbf16>, vector<256x128xf32> -> vector<256x128xf32>
    %c0_12 = arith.constant 0 : index
    %c0_13 = arith.constant 0 : index
    %22 = vector.load %arg5[%c0_12, %c0_13] : memref<1x128xf32, #tpu.memory_space<vmem>>, vector<1x128xf32>
    %23 = vector.broadcast %22 : vector<1x128xf32> to vector<256x128xf32>
    %24 = arith.addf %21, %23 : vector<256x128xf32>
    %c0_14 = arith.constant 0 : index
    %c0_15 = arith.constant 0 : index
    %25 = vector.load %arg6[%c0_14, %c0_15] : memref<256x128xf32, #tpu.memory_space<vmem>>, vector<256x128xf32>
    tpu.vector_store %arg6[%c0_14, %c0_15], %24 {strides = array<i32>} : memref<256x128xf32, #tpu.memory_space<vmem>>, vector<256x128xf32>,
    return
  }
  func.func @transform_0(%arg0: i32) -> (i32, i32) {
    %c0_i32 = arith.constant 0 : i32
    %c0_i32_0 = arith.constant 0 : i32
    return %arg0, %c0_i32 : i32, i32
  }
  func.func @transform_1(%arg0: i32) -> (i32, i32) {
    %c0_i32 = arith.constant 0 : i32
    %c0_i32_0 = arith.constant 0 : i32
    %c0_i32_1 = arith.constant 0 : i32
    return %c0_i32, %c0_i32_0 : i32, i32
  }
  func.func @transform_2(%arg0: i32) -> (i32, i32) {
    %c0_i32 = arith.constant 0 : i32
    %c0_i32_0 = arith.constant 0 : i32
    %c0_i32_1 = arith.constant 0 : i32
    return %c0_i32, %c0_i32_0 : i32, i32
  }
  func.func @transform_3(%arg0: i32) -> (i32, i32) {
    %c0_i32 = arith.constant 0 : i32
    %c0_i32_0 = arith.constant 0 : i32
    %c0_i32_1 = arith.constant 0 : i32
    return %c0_i32, %c0_i32_0 : i32, i32
  }
  func.func @transform_4(%arg0: i32) -> (i32, i32) {
    %c0_i32 = arith.constant 0 : i32
    %c0_i32_0 = arith.constant 0 : i32
    %c0_i32_1 = arith.constant 0 : i32
    return %c0_i32, %c0_i32_0 : i32, i32
  }
  func.func @transform_5(%arg0: i32) -> (i32, i32) {
    %c0_i32 = arith.constant 0 : i32
    %c0_i32_0 = arith.constant 0 : i32
    return %arg0, %c0_i32 : i32, i32
  }
}

</mosaic_0001>

<llo_original>
// kernel: tpu_custom_call.1
$region0: #{tpu_custom_call.1}
  #allocation0 [shape = 'u32[]', space=smem, size = 0x4, offset = 0x4, fixed_abs, tag = 'smem constant byte address 0x4 - core index']
  #allocation1 [shape = 'u32[144,128]{1,0:T(1,128)}', space=vmem, size = 0x12000, scoped, tag = 'internal scratch']
  %s0 = inlined_call_operand.hbm [shape: bf16[512,128], index: 0, kind: input, shape index: {}]
  %s1 = inlined_call_operand.hbm [shape: bf16[128,256], index: 1, kind: input, shape index: {}]
  %s2 = inlined_call_operand.vmem [shape: f32[1,256], index: 2, kind: input, shape index: {}]
  %s3 = inlined_call_operand.hbm [shape: bf16[256,128], index: 3, kind: input, shape index: {}]
  %s4 = inlined_call_operand.vmem [shape: f32[1,128], index: 4, kind: input, shape index: {}]
  %s5 = inlined_call_operand.hbm [shape: f32[512,128], index: 5, kind: output, shape index: {}]
  %s6 = sld [smem:[#allocation0]]
  $region65: #{tpu_custom_call.1} parent=0
    _
  %s8 = ssub.s32 1, %s6
  %s9 = scalar_select 0, %s8, %s6
  $region1: #{tpu_custom_call.1} parent=0
    #allocation2 [shape = 'u8[131072]{0}', space=vmem, size = 0x20000, scoped, tag = 'input window, operand 0']
    #allocation3 [shape = 's32[2]{0}', space=sflag, size = 0x8, scoped, tag = 'scoped memory for tpu_custom_call.1']
    #allocation4 [shape = 's32[2]{0}', space=sflag, size = 0x8, scoped, tag = 'scoped memory for tpu_custom_call.1']
    #allocation5 [shape = 'u8[65536]{0}', space=vmem, size = 0x10000, scoped, tag = 'input window, operand 1, single buffered']
    #allocation6 [shape = 's32[1]{0}', space=sflag, size = 0x4, scoped, tag = 'scoped memory for tpu_custom_call.1']
    #allocation7 [shape = 'u8[65536]{0}', space=vmem, size = 0x10000, scoped, tag = 'input window, operand 3, single buffered']
    #allocation8 [shape = 'u8[262144]{0}', space=vmem, size = 0x40000, scoped, tag = 'output window, operand 0']
    %10 = vsyncpa [#allocation3], 0
    %s11 = scalar_lea.sflag [#allocation3], 1
    %12 = vsyncpa %s11, 0
    %13 = vsyncpa [#allocation6], 0
    %14 = vsyncpa [#allocation4], 0
    %s15 = scalar_lea.sflag [#allocation4], 1
    %16 = vsyncpa %s15, 0
    loop: start=0, step=1, limit=4
    $region2: #{tpu_custom_call.1} parent=1 // loop_pre_header
      _
    $region3: #{tpu_custom_call.1} parent=1 // loop_header
      %s18 = sphi 0, %s22
      %p19 = scmp.ge.s32.totalorder %s18, 4
      %s28 = sphi 0, %s30
      %s31 = sphi 0, %s28
      %s32 = sphi 0, %s31
      %s48 = sphi 0, %s32
      %s52 = sphi 0, %s52
      %s54 = sphi 0, %s52
      %s55 = sphi 0, %s54
      %s69 = sphi 0, %s55
      %s73 = sphi 0, %s73
      %s75 = sphi 0, %s73
      %s76 = sphi 0, %s75
      %s90 = sphi 0, %s76
      %s94 = sphi 0, %s94
      %s96 = sphi 0, %s94
      %s97 = sphi 0, %s96
      %s111 = sphi 0, %s97
      %s115 = sphi 0, %s115
      %s117 = sphi 0, %s115
      %s118 = sphi 0, %s117
      %s132 = sphi 0, %s118
      %s138 = sphi 0, %s140
      %s141 = sphi 0, %s138
      %s142 = sphi 0, %s141
      %s158 = sphi 0, %s142
    $region4: #{tpu_custom_call.1} parent=1 // loop_header_branch
      %21 = sbr.rel (%p19) target = $region8
    $region5: #{tpu_custom_call.1} parent=1 // loop_body
      %s23 = ssub.s32 %s18, 1
      %s24 = ssub.s32 %s18, 2
      %s25 = sadd.s32 %s18, 1
      %s26 = ssub.s32 %s18, %s25
      %p27 = scmp.eq.s32.totalorder %s26, 0
      %s29 = sadd.s32 %s28, 1
      %s30 = scalar_select %p27, %s28, %s29
      %p33 = pneg %p27
      %p34 = scmp.eq.s32.totalorder %s18, 1
      %p35 = por %p33, %p34
      %p36 = scmp.ne.s32.totalorder %s28, %s31
      %p37 = scmp.eq.s32.totalorder %s18, 0
      %p38 = por %p36, %p37
      %p39 = scmp.ne.s32.totalorder %s28, %s31
      %p40 = scmp.eq.s32.totalorder %s23, 1
      %p41 = por %p39, %p40
      %p42 = scmp.ne.s32.totalorder %s31, %s32
      %p43 = scmp.eq.s32.totalorder %s23, 0
      %p44 = por %p42, %p43
      %p45 = scmp.ne.s32.totalorder %s31, %s32
      %p46 = scmp.eq.s32.totalorder %s24, 1
      %p47 = por %p45, %p46
      %p49 = scmp.ne.s32.totalorder %s32, %s48
      %p50 = scmp.eq.s32.totalorder %s24, 0
      %p51 = por %p49, %p50
      %s53 = sadd.s32 %s52, 1
      %p56 = scmp.eq.s32.totalorder %s18, 1
      %p57 = scmp.ne.s32.totalorder %s52, %s54
      %p58 = scmp.eq.s32.totalorder %s18, 0
      %p59 = por %p57, %p58
      %p60 = scmp.ne.s32.totalorder %s52, %s54
      %p61 = scmp.eq.s32.totalorder %s23, 1
      %p62 = por %p60, %p61
      %p63 = scmp.ne.s32.totalorder %s54, %s55
      %p64 = scmp.eq.s32.totalorder %s23, 0
      %p65 = por %p63, %p64
      %p66 = scmp.ne.s32.totalorder %s54, %s55
      %p67 = scmp.eq.s32.totalorder %s24, 1
      %p68 = por %p66, %p67
      %p70 = scmp.ne.s32.totalorder %s55, %s69
      %p71 = scmp.eq.s32.totalorder %s24, 0
      %p72 = por %p70, %p71
      %s74 = sadd.s32 %s73, 1
      %p77 = scmp.eq.s32.totalorder %s18, 1
      %p78 = scmp.ne.s32.totalorder %s73, %s75
      %p79 = scmp.eq.s32.totalorder %s18, 0
      %p80 = por %p78, %p79
      %p81 = scmp.ne.s32.totalorder %s73, %s75
      %p82 = scmp.eq.s32.totalorder %s23, 1
      %p83 = por %p81, %p82
      %p84 = scmp.ne.s32.totalorder %s75, %s76
      %p85 = scmp.eq.s32.totalorder %s23, 0
      %p86 = por %p84, %p85
      %p87 = scmp.ne.s32.totalorder %s75, %s76
      %p88 = scmp.eq.s32.totalorder %s24, 1
      %p89 = por %p87, %p88
      %p91 = scmp.ne.s32.totalorder %s76, %s90
      %p92 = scmp.eq.s32.totalorder %s24, 0
      %p93 = por %p91, %p92
      %s95 = sadd.s32 %s94, 1
      %p98 = scmp.eq.s32.totalorder %s18, 1
      %p99 = scmp.ne.s32.totalorder %s94, %s96
      %p100 = scmp.eq.s32.totalorder %s18, 0
      %p101 = por %p99, %p100
      %p102 = scmp.ne.s32.totalorder %s94, %s96
      %p103 = scmp.eq.s32.totalorder %s23, 1
      %p104 = por %p102, %p103
      %p105 = scmp.ne.s32.totalorder %s96, %s97
      %p106 = scmp.eq.s32.totalorder %s23, 0
      %p107 = por %p105, %p106
      %p108 = scmp.ne.s32.totalorder %s96, %s97
      %p109 = scmp.eq.s32.totalorder %s24, 1
      %p110 = por %p108, %p109
      %p112 = scmp.ne.s32.totalorder %s97, %s111
      %p113 = scmp.eq.s32.totalorder %s24, 0
      %p114 = por %p112, %p113
      %s116 = sadd.s32 %s115, 1
      %p119 = scmp.eq.s32.totalorder %s18, 1
      %p120 = scmp.ne.s32.totalorder %s115, %s117
      %p121 = scmp.eq.s32.totalorder %s18, 0
      %p122 = por %p120, %p121
      %p123 = scmp.ne.s32.totalorder %s115, %s117
      %p124 = scmp.eq.s32.totalorder %s23, 1
      %p125 = por %p123, %p124
      %p126 = scmp.ne.s32.totalorder %s117, %s118
      %p127 = scmp.eq.s32.totalorder %s23, 0
      %p128 = por %p126, %p127
      %p129 = scmp.ne.s32.totalorder %s117, %s118
      %p130 = scmp.eq.s32.totalorder %s24, 1
      %p131 = por %p129, %p130
      %p133 = scmp.ne.s32.totalorder %s118, %s132
      %p134 = scmp.eq.s32.totalorder %s24, 0
      %p135 = por %p133, %p134
      %s136 = ssub.s32 %s18, %s25
      %p137 = scmp.eq.s32.totalorder %s136, 0
      %s139 = sadd.s32 %s138, 1
      %s140 = scalar_select %p137, %s138, %s139
      %p143 = pneg %p137
      %p144 = scmp.eq.s32.totalorder %s18, 1
      %p145 = por %p143, %p144
      %p146 = scmp.ne.s32.totalorder %s138, %s141
      %p147 = scmp.eq.s32.totalorder %s18, 0
      %p148 = por %p146, %p147
      %p149 = scmp.ne.s32.totalorder %s138, %s141
      %p150 = scmp.eq.s32.totalorder %s23, 1
      %p151 = por %p149, %p150
      %p152 = scmp.ne.s32.totalorder %s141, %s142
      %p153 = scmp.eq.s32.totalorder %s23, 0
      %p154 = por %p152, %p153
      %p155 = scmp.ne.s32.totalorder %s141, %s142
      %p156 = scmp.eq.s32.totalorder %s24, 1
      %p157 = por %p155, %p156
      %p159 = scmp.ne.s32.totalorder %s142, %s158
      %p160 = scmp.eq.s32.totalorder %s24, 0
      %p161 = por %p159, %p160
      %p162 = scmp.le.s32.totalorder 1, %s18
      %p163 = scmp.lt.s32.totalorder %s18, 3
      %p164 = pnand %p162, %p163
      %p165 = pneg %p164
      // Predicated region
      $region9: #{tpu_custom_call.1} parent=5 // pred_check
        _
      $region10: #{tpu_custom_call.1} parent=5 // pred_check_branch
        %167 = sbr.rel (%p164) target = $region12
      $region11: #{tpu_custom_call.1} parent=5 // pred_region
        %s168 = ssub.s32 %s18, 1
        // Predicated region
        $region13: #{tpu_custom_call.1} parent=11 // pred_check
          %p169 = pneg %p65
        $region14: #{tpu_custom_call.1} parent=11 // pred_check_branch
          %171 = sbr.rel (%p169) target = $region16
        $region15: #{tpu_custom_call.1} parent=11 // pred_region
          %s173 = ssub.s32 2048, 2048
          %174 = vsyncadd [#allocation6], %s173
          %s175 = sshll.u32 [#allocation5], 4
          %s176 = int_to_ptr.vmem [resolvable:$true] %s175
          %181 = dma.hbm_to_vmem [thread:$0]  %s1, 2048, %s176, [#allocation6], 128, 128, 8
        $region16: #{tpu_custom_call.1} parent=11 // pred_fallthru
          _
        // Predicated region
        $region17: #{tpu_custom_call.1} parent=11 // pred_check
          %p182 = pneg %p86
        $region18: #{tpu_custom_call.1} parent=11 // pred_check_branch
          %184 = sbr.rel (%p182) target = $region20
        $region19: #{tpu_custom_call.1} parent=11 // pred_region
          _
        $region20: #{tpu_custom_call.1} parent=11 // pred_fallthru
          _
        // Predicated region
        $region21: #{tpu_custom_call.1} parent=11 // pred_check
          %p185 = pneg %p107
        $region22: #{tpu_custom_call.1} parent=11 // pred_check_branch
          %187 = sbr.rel (%p185) target = $region24
        $region23: #{tpu_custom_call.1} parent=11 // pred_region
          %s189 = ssub.s32 2048, 2048
          %190 = vsyncadd [#allocation6], %s189
          %s191 = sshll.u32 [#allocation7], 4
          %s192 = int_to_ptr.vmem [resolvable:$true] %s191
          %197 = dma.hbm_to_vmem [thread:$0]  %s3, 2048, %s192, [#allocation6], 64, 64, 4
        $region24: #{tpu_custom_call.1} parent=11 // pred_fallthru
          _
        // Predicated region
        $region25: #{tpu_custom_call.1} parent=11 // pred_check
          %p198 = pneg %p128
        $region26: #{tpu_custom_call.1} parent=11 // pred_check_branch
          %200 = sbr.rel (%p198) target = $region28
        $region27: #{tpu_custom_call.1} parent=11 // pred_region
          _
        $region28: #{tpu_custom_call.1} parent=11 // pred_fallthru
          _
      $region12: #{tpu_custom_call.1} parent=5 // pred_fallthru
        _
      %p201 = scmp.lt.s32.totalorder %s18, 2
      // Predicated region
      $region29: #{tpu_custom_call.1} parent=5 // pred_check
        %p202 = pneg %p201
      $region30: #{tpu_custom_call.1} parent=5 // pred_check_branch
        %204 = sbr.rel (%p202) target = $region32
      $region31: #{tpu_custom_call.1} parent=5 // pred_region
        // Predicated region
        $region33: #{tpu_custom_call.1} parent=31 // pred_check
          %p205 = pneg %p38
        $region34: #{tpu_custom_call.1} parent=31 // pred_check_branch
          %207 = sbr.rel (%p205) target = $region36
        $region35: #{tpu_custom_call.1} parent=31 // pred_region
          %s208 = sand.u32 %s28, 1
          %s209 = scalar_lea.sflag [#allocation3], %s208
          %s210 = sand.u32 %s28, 1
          %s211 = smul.addr %s210, 128
          %s212 = scalar_lea.vmem [#allocation2], %s211
          %s213 = smul.u32 32, %s18
          %s215 = ssub.s32 2048, 2048
          %216 = vsyncadd %s209, %s215
          %s217 = smul.addr %s213, 64
          %s218 = scalar_lea.hbm %s0, %s217
          %s219 = sshll.u32 %s212, 4
          %s220 = int_to_ptr.vmem [resolvable:$true] %s219
          %225 = dma.hbm_to_vmem [thread:$0]  %s218, 2048, %s220, %s209, 64, 64, 4
        $region36: #{tpu_custom_call.1} parent=31 // pred_fallthru
          _
      $region32: #{tpu_custom_call.1} parent=5 // pred_fallthru
        _
      %p226 = scmp.le.s32.totalorder 1, %s18
      %p227 = scmp.lt.s32.totalorder %s18, 3
      %p228 = pnand %p226, %p227
      %p229 = pneg %p228
      // Predicated region
      $region37: #{tpu_custom_call.1} parent=5 // pred_check
        _
      $region38: #{tpu_custom_call.1} parent=5 // pred_check_branch
        %231 = sbr.rel (%p228) target = $region40
      $region39: #{tpu_custom_call.1} parent=5 // pred_region
        %s232 = ssub.s32 %s18, 1
        %s233 = sand.u32 %s31, 1
        %s234 = scalar_lea.sflag [#allocation3], %s233
        %s235 = sand.u32 %s31, 1
        %s236 = smul.addr %s235, 128
        %s237 = scalar_lea.vmem [#allocation2], %s236
        // Predicated region
        $region41: #{tpu_custom_call.1} parent=39 // pred_check
          %p238 = pneg %p44
        $region42: #{tpu_custom_call.1} parent=39 // pred_check_branch
          %240 = sbr.rel (%p238) target = $region44
        $region43: #{tpu_custom_call.1} parent=39 // pred_region
          %241 = dma.done %s234, 2048
        $region44: #{tpu_custom_call.1} parent=39 // pred_fallthru
          _
        // Predicated region
        $region45: #{tpu_custom_call.1} parent=39 // pred_check
          %p242 = pneg %p65
        $region46: #{tpu_custom_call.1} parent=39 // pred_check_branch
          %244 = sbr.rel (%p242) target = $region48
        $region47: #{tpu_custom_call.1} parent=39 // pred_region
          %245 = dma.done [#allocation6], 2048
        $region48: #{tpu_custom_call.1} parent=39 // pred_fallthru
          _
        // Predicated region
        $region49: #{tpu_custom_call.1} parent=39 // pred_check
          %p246 = pneg %p107
        $region50: #{tpu_custom_call.1} parent=39 // pred_check_branch
          %248 = sbr.rel (%p246) target = $region52
        $region51: #{tpu_custom_call.1} parent=39 // pred_region
          %249 = dma.done [#allocation6], 2048
        $region52: #{tpu_custom_call.1} parent=39 // pred_fallthru
          _
        %s250 = sand.u32 %s31, 1
        %s251 = scalar_lea.sflag [#allocation3], %s250
        %s252 = sand.u32 %s31, 1
        %s253 = smul.addr %s252, 128
        %s254 = scalar_lea.vmem [#allocation2], %s253
        %p255 = pneg %p44
        %p256 = pneg %p41
        %p257 = pneg %p65
        %p258 = pneg %p62
        %p259 = pneg %p86
        %p260 = pneg %p83
        %p261 = pneg %p107
        %p262 = pneg %p104
        %p263 = pneg %p128
        %p264 = pneg %p125
        %p265 = pneg %p154
        %p266 = pneg %p151
        %s267 = sand.u32 %s141, 1
        %s268 = scalar_lea.sflag [#allocation4], %s267
        %s269 = sand.u32 %s141, 1
        %s270 = smul.addr %s269, 256
        %s271 = scalar_lea.vmem [#allocation8], %s270
        %s272 = smul.u32 32, %s23
        %s273 = smul.u32 32, %s23
        %v275 = vld [vmem:[%s237] sm:$0xf]
        %v276 = vld [vmem:[%s237 + $0x4] sm:$0xf]
        %v277 = vld [vmem:[%s237 + $0x8] sm:$0xf]
        %v278 = vld [vmem:[%s237 + $0xc] sm:$0xf]
        %v279 = vld [vmem:[%s237 + $0x10] sm:$0xf]
        %v280 = vld [vmem:[%s237 + $0x14] sm:$0xf]
        %v281 = vld [vmem:[%s237 + $0x18] sm:$0xf]
        %v282 = vld [vmem:[%s237 + $0x1c] sm:$0xf]
        %v283 = vld [vmem:[%s237 + $0x20] sm:$0xf]
        %v284 = vld [vmem:[%s237 + $0x24] sm:$0xf]
        %v285 = vld [vmem:[%s237 + $0x28] sm:$0xf]
        %v286 = vld [vmem:[%s237 + $0x2c] sm:$0xf]
        %v287 = vld [vmem:[%s237 + $0x30] sm:$0xf]
        %v288 = vld [vmem:[%s237 + $0x34] sm:$0xf]
        %v289 = vld [vmem:[%s237 + $0x38] sm:$0xf]
        %v290 = vld [vmem:[%s237 + $0x3c] sm:$0xf]
        %v291 = vld [vmem:[%s237 + $0x40] sm:$0xf]
        %v292 = vld [vmem:[%s237 + $0x44] sm:$0xf]
        %v293 = vld [vmem:[%s237 + $0x48] sm:$0xf]
        %v294 = vld [vmem:[%s237 + $0x4c] sm:$0xf]
        %v295 = vld [vmem:[%s237 + $0x50] sm:$0xf]
        %v296 = vld [vmem:[%s237 + $0x54] sm:$0xf]
        %v297 = vld [vmem:[%s237 + $0x58] sm:$0xf]
        %v298 = vld [vmem:[%s237 + $0x5c] sm:$0xf]
        %v299 = vld [vmem:[%s237 + $0x60] sm:$0xf]
        %v300 = vld [vmem:[%s237 + $0x64] sm:$0xf]
        %v301 = vld [vmem:[%s237 + $0x68] sm:$0xf]
        %v302 = vld [vmem:[%s237 + $0x6c] sm:$0xf]
        %v303 = vld [vmem:[%s237 + $0x70] sm:$0xf]
        %v304 = vld [vmem:[%s237 + $0x74] sm:$0xf]
        %v305 = vld [vmem:[%s237 + $0x78] sm:$0xf]
        %v306 = vld [vmem:[%s237 + $0x7c] sm:$0xf]
        %v307 = vld [vmem:[#allocation5] sm:$0xff]
        %v308 = vld [vmem:[#allocation5 + $0x8] sm:$0xff]
        %v309 = vld [vmem:[#allocation5 + $0x10] sm:$0xff]
        %v310 = vld [vmem:[#allocation5 + $0x18] sm:$0xff]
        %v311 = vld [vmem:[#allocation5 + $0x20] sm:$0xff]
        %v312 = vld [vmem:[#allocation5 + $0x28] sm:$0xff]
        %v313 = vld [vmem:[#allocation5 + $0x30] sm:$0xff]
        %v314 = vld [vmem:[#allocation5 + $0x38] sm:$0xff]
        %v315 = vld [vmem:[#allocation5 + $0x40] sm:$0xff]
        %v316 = vld [vmem:[#allocation5 + $0x48] sm:$0xff]
        %v317 = vld [vmem:[#allocation5 + $0x50] sm:$0xff]
        %v318 = vld [vmem:[#allocation5 + $0x58] sm:$0xff]
        %v319 = vld [vmem:[#allocation5 + $0x60] sm:$0xff]
        %v320 = vld [vmem:[#allocation5 + $0x68] sm:$0xff]
        %v321 = vld [vmem:[#allocation5 + $0x70] sm:$0xff]
        %v322 = vld [vmem:[#allocation5 + $0x78] sm:$0xff]
        %v323 = vld [vmem:[%s2] sm:$0x3]
        %v325 = vlaneseq
        %v326 = vshrl.u32 %v325, 7
        %v327 = vsub.s32 0, %v326
        %v328 = vrot.slane %v323, %v327
        %v329 = vlaneseq
        %v330 = vshrl.u32 %v329, 7
        %v331 = vsub.s32 1, %v330
        %v332 = vrot.slane %v323, %v331
        %v367 = vunpack.c.l.b16 %v275
        %v368 = vunpack.c.l.b16 %v276
        %v369 = vunpack.c.l.b16 %v277
        %v370 = vunpack.c.l.b16 %v278
        %v371 = vunpack.c.l.b16 %v279
        %v372 = vunpack.c.l.b16 %v280
        %v373 = vunpack.c.l.b16 %v281
        %v374 = vunpack.c.l.b16 %v282
        %v375 = vunpack.c.l.b16 %v283
        %v376 = vunpack.c.l.b16 %v284
        %v377 = vunpack.c.l.b16 %v285
        %v378 = vunpack.c.l.b16 %v286
        %v379 = vunpack.c.l.b16 %v287
        %v380 = vunpack.c.l.b16 %v288
        %v381 = vunpack.c.l.b16 %v289
        %v382 = vunpack.c.l.b16 %v290
        %v383 = vunpack.c.l.b16 %v291
        %v384 = vunpack.c.l.b16 %v292
        %v385 = vunpack.c.l.b16 %v293
        %v386 = vunpack.c.l.b16 %v294
        %v387 = vunpack.c.l.b16 %v295
        %v388 = vunpack.c.l.b16 %v296
        %v389 = vunpack.c.l.b16 %v297
        %v390 = vunpack.c.l.b16 %v298
        %v391 = vunpack.c.l.b16 %v299
        %v392 = vunpack.c.l.b16 %v300
        %v393 = vunpack.c.l.b16 %v301
        %v394 = vunpack.c.l.b16 %v302
        %v395 = vunpack.c.l.b16 %v303
        %v396 = vunpack.c.l.b16 %v304
        %v397 = vunpack.c.l.b16 %v305
        %v398 = vunpack.c.l.b16 %v306
        %v399 = vpack.c.b16 %v368, %v367
        %v400 = vpack.c.b16 %v370, %v369
        %v401 = vpack.c.b16 %v372, %v371
        %v402 = vpack.c.b16 %v374, %v373
        %v403 = vpack.c.b16 %v376, %v375
        %v404 = vpack.c.b16 %v378, %v377
        %v405 = vpack.c.b16 %v380, %v379
        %v406 = vpack.c.b16 %v382, %v381
        %v407 = vpack.c.b16 %v384, %v383
        %v408 = vpack.c.b16 %v386, %v385
        %v409 = vpack.c.b16 %v388, %v387
        %v410 = vpack.c.b16 %v390, %v389
        %v411 = vpack.c.b16 %v392, %v391
        %v412 = vpack.c.b16 %v394, %v393
        %v413 = vpack.c.b16 %v396, %v395
        %v414 = vpack.c.b16 %v398, %v397
        %v447 = vunpack.c.l.b16 %v307
        %v448 = vunpack.c.h.b16 %v307
        %v449 = vunpack.c.l.b16 %v308
        %v450 = vunpack.c.h.b16 %v308
        %v451 = vunpack.c.l.b16 %v309
        %v452 = vunpack.c.h.b16 %v309
        %v453 = vunpack.c.l.b16 %v310
        %v454 = vunpack.c.h.b16 %v310
        %v455 = vunpack.c.l.b16 %v311
        %v456 = vunpack.c.h.b16 %v311
        %v457 = vunpack.c.l.b16 %v312
        %v458 = vunpack.c.h.b16 %v312
        %v459 = vunpack.c.l.b16 %v313
        %v460 = vunpack.c.h.b16 %v313
        %v461 = vunpack.c.l.b16 %v314
        %v462 = vunpack.c.h.b16 %v314
        %v463 = vunpack.c.l.b16 %v315
        %v464 = vunpack.c.h.b16 %v315
        %v465 = vunpack.c.l.b16 %v316
        %v466 = vunpack.c.h.b16 %v316
        %v467 = vunpack.c.l.b16 %v317
        %v468 = vunpack.c.h.b16 %v317
        %v469 = vunpack.c.l.b16 %v318
        %v470 = vunpack.c.h.b16 %v318
        %v471 = vunpack.c.l.b16 %v319
        %v472 = vunpack.c.h.b16 %v319
        %v473 = vunpack.c.l.b16 %v320
        %v474 = vunpack.c.h.b16 %v320
        %v475 = vunpack.c.l.b16 %v321
        %v476 = vunpack.c.h.b16 %v321
        %v477 = vunpack.c.l.b16 %v322
        %v478 = vunpack.c.h.b16 %v322
        %v479 = vpack.c.b16 %v449, %v447
        %v480 = vpack.c.b16 %v450, %v448
        %v481 = vpack.c.b16 %v453, %v451
        %v482 = vpack.c.b16 %v454, %v452
        %v483 = vpack.c.b16 %v457, %v455
        %v484 = vpack.c.b16 %v458, %v456
        %v485 = vpack.c.b16 %v461, %v459
        %v486 = vpack.c.b16 %v462, %v460
        %v487 = vpack.c.b16 %v465, %v463
        %v488 = vpack.c.b16 %v466, %v464
        %v489 = vpack.c.b16 %v469, %v467
        %v490 = vpack.c.b16 %v470, %v468
        %v491 = vpack.c.b16 %v473, %v471
        %v492 = vpack.c.b16 %v474, %v472
        %v493 = vpack.c.b16 %v477, %v475
        %v494 = vpack.c.b16 %v478, %v476
        %511 = vmatprep.subr.bf16.mxu0 %v480
        %512 = vmatpush1.bf16.msra.mxu0 %v479
        %513 = vmatprep.subr.bf16.mxu0 %v482
        %514 = vmatpush1.bf16.msra.mxu0 %v481
        %515 = vmatprep.subr.bf16.mxu0 %v484
        %516 = vmatpush1.bf16.msra.mxu0 %v483
        %517 = vmatprep.subr.bf16.mxu0 %v486
        %518 = vmatpush1.bf16.msra.mxu0 %v485
        %519 = vmatprep.subr.bf16.mxu0 %v488
        %520 = vmatpush1.bf16.msra.mxu0 %v487
        %521 = vmatprep.subr.bf16.mxu0 %v490
        %522 = vmatpush1.bf16.msra.mxu0 %v489
        %523 = vmatprep.subr.bf16.mxu0 %v492
        %524 = vmatpush1.bf16.msra.mxu0 %v491
        %525 = vmatprep.subr.bf16.mxu0 %v494
        %526 = vmatpush1.bf16.msra.mxu0 %v493
        %527 = vmatprep.subr.bf16.mxu0 0
        %528 = vmatpush1.bf16.msra.mxu0 0
        %529 = vmatprep.subr.bf16.mxu0 0
        %530 = vmatpush1.bf16.msra.mxu0 0
        %531 = vmatprep.subr.bf16.mxu0 0
        %532 = vmatpush1.bf16.msra.mxu0 0
        %533 = vmatprep.subr.bf16.mxu0 0
        %534 = vmatpush1.bf16.msra.mxu0 0
        %535 = vmatprep.subr.bf16.mxu0 0
        %536 = vmatpush1.bf16.msra.mxu0 0
        %537 = vmatprep.subr.bf16.mxu0 0
        %538 = vmatpush1.bf16.msra.mxu0 0
        %539 = vmatprep.subr.bf16.mxu0 0
        %540 = vmatpush1.bf16.msra.mxu0 0
        %541 = vmatprep.subr.bf16.mxu0 0
        %542 = vmatpush1.bf16.msra.mxu0 0
        %543 = vmatprep.mubr.bf16.mxu0 0
        %544 = vmatmul.mubr.bf16.gmra.mrb[0].mxu0 %v399
        %v545 = vpop.f32.mrb[0].mxu0
        %v546 = vadd.f32 %v328, %v545
        %v547 = vpop.f32.mrb[0].mxu0
        %v548 = vadd.f32 %v332, %v547
        %v549 = vpop.f32.mrb[0].mxu0
        %v550 = vadd.f32 %v328, %v549
        %v551 = vpop.f32.mrb[0].mxu0
        %v552 = vadd.f32 %v332, %v551
        %553 = vmatprep.mubr.bf16.mxu0 0
        %554 = vmatmul.mubr.bf16.gmra.mrb[0].mxu0 %v400
        %v555 = vpop.f32.mrb[0].mxu0
        %v556 = vadd.f32 %v328, %v555
        %v557 = vpop.f32.mrb[0].mxu0
        %v558 = vadd.f32 %v332, %v557
        %v559 = vpop.f32.mrb[0].mxu0
        %v560 = vadd.f32 %v328, %v559
        %v561 = vpop.f32.mrb[0].mxu0
        %v562 = vadd.f32 %v332, %v561
        %563 = vmatprep.mubr.bf16.mxu0 0
        %564 = vmatmul.mubr.bf16.gmra.mrb[0].mxu0 %v401
        %v565 = vpop.f32.mrb[0].mxu0
        %v566 = vadd.f32 %v328, %v565
        %v567 = vpop.f32.mrb[0].mxu0
        %v568 = vadd.f32 %v332, %v567
        %v569 = vpop.f32.mrb[0].mxu0
        %v570 = vadd.f32 %v328, %v569
        %v571 = vpop.f32.mrb[0].mxu0
        %v572 = vadd.f32 %v332, %v571
        %573 = vmatprep.mubr.bf16.mxu0 0
        %574 = vmatmul.mubr.bf16.gmra.mrb[0].mxu0 %v402
        %v575 = vpop.f32.mrb[0].mxu0
        %v576 = vadd.f32 %v328, %v575
        %v577 = vpop.f32.mrb[0].mxu0
        %v578 = vadd.f32 %v332, %v577
        %v579 = vpop.f32.mrb[0].mxu0
        %v580 = vadd.f32 %v328, %v579
        %v581 = vpop.f32.mrb[0].mxu0
        %v582 = vadd.f32 %v332, %v581
        %583 = vmatprep.mubr.bf16.mxu0 0
        %584 = vmatmul.mubr.bf16.gmra.mrb[0].mxu0 %v403
        %v585 = vpop.f32.mrb[0].mxu0
        %v586 = vadd.f32 %v328, %v585
        %v587 = vpop.f32.mrb[0].mxu0
        %v588 = vadd.f32 %v332, %v587
        %v589 = vpop.f32.mrb[0].mxu0
        %v590 = vadd.f32 %v328, %v589
        %v591 = vpop.f32.mrb[0].mxu0
        %v592 = vadd.f32 %v332, %v591
        %593 = vmatprep.mubr.bf16.mxu0 0
        %594 = vmatmul.mubr.bf16.gmra.mrb[0].mxu0 %v404
        %v595 = vpop.f32.mrb[0].mxu0
        %v596 = vadd.f32 %v328, %v595
        %v597 = vpop.f32.mrb[0].mxu0
        %v598 = vadd.f32 %v332, %v597
        %v599 = vpop.f32.mrb[0].mxu0
        %v600 = vadd.f32 %v328, %v599
        %v601 = vpop.f32.mrb[0].mxu0
        %v602 = vadd.f32 %v332, %v601
        %603 = vmatprep.mubr.bf16.mxu0 0
        %604 = vmatmul.mubr.bf16.gmra.mrb[0].mxu0 %v405
        %v605 = vpop.f32.mrb[0].mxu0
        %v606 = vadd.f32 %v328, %v605
        %v607 = vpop.f32.mrb[0].mxu0
        %v608 = vadd.f32 %v332, %v607
        %v609 = vpop.f32.mrb[0].mxu0
        %v610 = vadd.f32 %v328, %v609
        %v611 = vpop.f32.mrb[0].mxu0
        %v612 = vadd.f32 %v332, %v611
        %613 = vmatprep.mubr.bf16.mxu0 0
        %614 = vmatmul.mubr.bf16.gmra.mrb[0].mxu0 %v406
        %v615 = vpop.f32.mrb[0].mxu0
        %v616 = vadd.f32 %v328, %v615
        %v617 = vpop.f32.mrb[0].mxu0
        %v618 = vadd.f32 %v332, %v617
        %v619 = vpop.f32.mrb[0].mxu0
        %v620 = vadd.f32 %v328, %v619
        %v621 = vpop.f32.mrb[0].mxu0
        %v622 = vadd.f32 %v332, %v621
        %623 = vmatprep.mubr.bf16.mxu0 0
        %624 = vmatmul.mubr.bf16.gmra.mrb[0].mxu0 %v407
        %v625 = vpop.f32.mrb[0].mxu0
        %v626 = vadd.f32 %v328, %v625
        %v627 = vpop.f32.mrb[0].mxu0
        %v628 = vadd.f32 %v332, %v627
        %v629 = vpop.f32.mrb[0].mxu0
        %v630 = vadd.f32 %v328, %v629
        %v631 = vpop.f32.mrb[0].mxu0
        %v632 = vadd.f32 %v332, %v631
        %633 = vmatprep.mubr.bf16.mxu0 0
        %634 = vmatmul.mubr.bf16.gmra.mrb[0].mxu0 %v408
        %v635 = vpop.f32.mrb[0].mxu0
        %v636 = vadd.f32 %v328, %v635
        %v637 = vpop.f32.mrb[0].mxu0
        %v638 = vadd.f32 %v332, %v637
        %v639 = vpop.f32.mrb[0].mxu0
        %v640 = vadd.f32 %v328, %v639
        %v641 = vpop.f32.mrb[0].mxu0
        %v642 = vadd.f32 %v332, %v641
        %643 = vmatprep.mubr.bf16.mxu0 0
        %644 = vmatmul.mubr.bf16.gmra.mrb[0].mxu0 %v409
        %v645 = vpop.f32.mrb[0].mxu0
        %v646 = vadd.f32 %v328, %v645
        %v647 = vpop.f32.mrb[0].mxu0
        %v648 = vadd.f32 %v332, %v647
        %v649 = vpop.f32.mrb[0].mxu0
        %v650 = vadd.f32 %v328, %v649
        %v651 = vpop.f32.mrb[0].mxu0
        %v652 = vadd.f32 %v332, %v651
        %653 = vmatprep.mubr.bf16.mxu0 0
        %654 = vmatmul.mubr.bf16.gmra.mrb[0].mxu0 %v410
        %v655 = vpop.f32.mrb[0].mxu0
        %v656 = vadd.f32 %v328, %v655
        %v657 = vpop.f32.mrb[0].mxu0
        %v658 = vadd.f32 %v332, %v657
        %v659 = vpop.f32.mrb[0].mxu0
        %v660 = vadd.f32 %v328, %v659
        %v661 = vpop.f32.mrb[0].mxu0
        %v662 = vadd.f32 %v332, %v661
        %663 = vmatprep.mubr.bf16.mxu0 0
        %664 = vmatmul.mubr.bf16.gmra.mrb[0].mxu0 %v411
        %v665 = vpop.f32.mrb[0].mxu0
        %v666 = vadd.f32 %v328, %v665
        %v667 = vpop.f32.mrb[0].mxu0
        %v668 = vadd.f32 %v332, %v667
        %v669 = vpop.f32.mrb[0].mxu0
        %v670 = vadd.f32 %v328, %v669
        %v671 = vpop.f32.mrb[0].mxu0
        %v672 = vadd.f32 %v332, %v671
        %673 = vmatprep.mubr.bf16.mxu0 0
        %674 = vmatmul.mubr.bf16.gmra.mrb[0].mxu0 %v412
        %v675 = vpop.f32.mrb[0].mxu0
        %v676 = vadd.f32 %v328, %v675
        %v677 = vpop.f32.mrb[0].mxu0
        %v678 = vadd.f32 %v332, %v677
        %v679 = vpop.f32.mrb[0].mxu0
        %v680 = vadd.f32 %v328, %v679
        %v681 = vpop.f32.mrb[0].mxu0
        %v682 = vadd.f32 %v332, %v681
        %683 = vmatprep.mubr.bf16.mxu0 0
        %684 = vmatmul.mubr.bf16.gmra.mrb[0].mxu0 %v413
        %v685 = vpop.f32.mrb[0].mxu0
        %v686 = vadd.f32 %v328, %v685
        %v687 = vpop.f32.mrb[0].mxu0
        %v688 = vadd.f32 %v332, %v687
        %v689 = vpop.f32.mrb[0].mxu0
        %v690 = vadd.f32 %v328, %v689
        %v691 = vpop.f32.mrb[0].mxu0
        %v692 = vadd.f32 %v332, %v691
        %693 = vmatprep.mubr.bf16.mxu0 0
        %694 = vmatmul.mubr.bf16.gmra.mrb[0].mxu0 %v414
        %v695 = vpop.f32.mrb[0].mxu0
        %v696 = vadd.f32 %v328, %v695
        %v697 = vpop.f32.mrb[0].mxu0
        %v698 = vadd.f32 %v332, %v697
        %v699 = vpop.f32.mrb[0].mxu0
        %v700 = vadd.f32 %v328, %v699
        %v701 = vpop.f32.mrb[0].mxu0
        %v702 = vadd.f32 %v332, %v701
        %703 = vdwg.mxu0
        %v704 = vmul.f32 %v546, 0.5
        %v705 = vmul.f32 %v548, 0.5
        %v706 = vmul.f32 %v550, 0.5
        %v707 = vmul.f32 %v552, 0.5
        %v708 = vmul.f32 %v556, 0.5
        %v709 = vmul.f32 %v558, 0.5
        %v710 = vmul.f32 %v560, 0.5
        %v711 = vmul.f32 %v562, 0.5
        %v712 = vmul.f32 %v566, 0.5
        %v713 = vmul.f32 %v568, 0.5
        %v714 = vmul.f32 %v570, 0.5
        %v715 = vmul.f32 %v572, 0.5
        %v716 = vmul.f32 %v576, 0.5
        %v717 = vmul.f32 %v578, 0.5
        %v718 = vmul.f32 %v580, 0.5
        %v719 = vmul.f32 %v582, 0.5
        %v720 = vmul.f32 %v586, 0.5
        %v721 = vmul.f32 %v588, 0.5
        %v722 = vmul.f32 %v590, 0.5
        %v723 = vmul.f32 %v592, 0.5
        %v724 = vmul.f32 %v596, 0.5
        %v725 = vmul.f32 %v598, 0.5
        %v726 = vmul.f32 %v600, 0.5
        %v727 = vmul.f32 %v602, 0.5
        %v728 = vmul.f32 %v606, 0.5
        %v729 = vmul.f32 %v608, 0.5
        %v730 = vmul.f32 %v610, 0.5
        %v731 = vmul.f32 %v612, 0.5
        %v732 = vmul.f32 %v616, 0.5
        %v733 = vmul.f32 %v618, 0.5
        %v734 = vmul.f32 %v620, 0.5
        %v735 = vmul.f32 %v622, 0.5
        %v736 = vmul.f32 %v626, 0.5
        %v737 = vmul.f32 %v628, 0.5
        %v738 = vmul.f32 %v630, 0.5
        %v739 = vmul.f32 %v632, 0.5
        %v740 = vmul.f32 %v636, 0.5
        %v741 = vmul.f32 %v638, 0.5
        %v742 = vmul.f32 %v640, 0.5
        %v743 = vmul.f32 %v642, 0.5
        %v744 = vmul.f32 %v646, 0.5
        %v745 = vmul.f32 %v648, 0.5
        %v746 = vmul.f32 %v650, 0.5
        %v747 = vmul.f32 %v652, 0.5
        %v748 = vmul.f32 %v656, 0.5
        %v749 = vmul.f32 %v658, 0.5
        %v750 = vmul.f32 %v660, 0.5
        %v751 = vmul.f32 %v662, 0.5
        %v752 = vmul.f32 %v666, 0.5
        %v753 = vmul.f32 %v668, 0.5
        %v754 = vmul.f32 %v670, 0.5
        %v755 = vmul.f32 %v672, 0.5
        %v756 = vmul.f32 %v676, 0.5
        %v757 = vmul.f32 %v678, 0.5
        %v758 = vmul.f32 %v680, 0.5
        %v759 = vmul.f32 %v682, 0.5
        %v760 = vmul.f32 %v686, 0.5
        %v761 = vmul.f32 %v688, 0.5
        %v762 = vmul.f32 %v690, 0.5
        %v763 = vmul.f32 %v692, 0.5
        %v764 = vmul.f32 %v696, 0.5
        %v765 = vmul.f32 %v698, 0.5
        %v766 = vmul.f32 %v700, 0.5
        %v767 = vmul.f32 %v702, 0.5
        %v768 = vmul.f32 %v546, 0.044715
        %v769 = vmul.f32 %v548, 0.044715
        %v770 = vmul.f32 %v550, 0.044715
        %v771 = vmul.f32 %v552, 0.044715
        %v772 = vmul.f32 %v556, 0.044715
        %v773 = vmul.f32 %v558, 0.044715
        %v774 = vmul.f32 %v560, 0.044715
        %v775 = vmul.f32 %v562, 0.044715
        %v776 = vmul.f32 %v566, 0.044715
        %v777 = vmul.f32 %v568, 0.044715
        %v778 = vmul.f32 %v570, 0.044715
        %v779 = vmul.f32 %v572, 0.044715
        %v780 = vmul.f32 %v576, 0.044715
        %v781 = vmul.f32 %v578, 0.044715
        %v782 = vmul.f32 %v580, 0.044715
        %v783 = vmul.f32 %v582, 0.044715
        %v784 = vmul.f32 %v586, 0.044715
        %v785 = vmul.f32 %v588, 0.044715
        %v786 = vmul.f32 %v590, 0.044715
        %v787 = vmul.f32 %v592, 0.044715
        %v788 = vmul.f32 %v596, 0.044715
        %v789 = vmul.f32 %v598, 0.044715
        %v790 = vmul.f32 %v600, 0.044715
        %v791 = vmul.f32 %v602, 0.044715
        %v792 = vmul.f32 %v606, 0.044715
        %v793 = vmul.f32 %v608, 0.044715
        %v794 = vmul.f32 %v610, 0.044715
        %v795 = vmul.f32 %v612, 0.044715
        %v796 = vmul.f32 %v616, 0.044715
        %v797 = vmul.f32 %v618, 0.044715
        %v798 = vmul.f32 %v620, 0.044715
        %v799 = vmul.f32 %v622, 0.044715
        %v800 = vmul.f32 %v626, 0.044715
        %v801 = vmul.f32 %v628, 0.044715
        %v802 = vmul.f32 %v630, 0.044715
        %v803 = vmul.f32 %v632, 0.044715
        %v804 = vmul.f32 %v636, 0.044715
        %v805 = vmul.f32 %v638, 0.044715
        %v806 = vmul.f32 %v640, 0.044715
        %v807 = vmul.f32 %v642, 0.044715
        %v808 = vmul.f32 %v646, 0.044715
        %v809 = vmul.f32 %v648, 0.044715
        %v810 = vmul.f32 %v650, 0.044715
        %v811 = vmul.f32 %v652, 0.044715
        %v812 = vmul.f32 %v656, 0.044715
        %v813 = vmul.f32 %v658, 0.044715
        %v814 = vmul.f32 %v660, 0.044715
        %v815 = vmul.f32 %v662, 0.044715
        %v816 = vmul.f32 %v666, 0.044715
        %v817 = vmul.f32 %v668, 0.044715
        %v818 = vmul.f32 %v670, 0.044715
        %v819 = vmul.f32 %v672, 0.044715
        %v820 = vmul.f32 %v676, 0.044715
        %v821 = vmul.f32 %v678, 0.044715
        %v822 = vmul.f32 %v680, 0.044715
        %v823 = vmul.f32 %v682, 0.044715
        %v824 = vmul.f32 %v686, 0.044715
        %v825 = vmul.f32 %v688, 0.044715
        %v826 = vmul.f32 %v690, 0.044715
        %v827 = vmul.f32 %v692, 0.044715
        %v828 = vmul.f32 %v696, 0.044715
        %v829 = vmul.f32 %v698, 0.044715
        %v830 = vmul.f32 %v700, 0.044715
        %v831 = vmul.f32 %v702, 0.044715
        %v832 = vmul.f32 %v768, %v546
        %v833 = vmul.f32 %v769, %v548
        %v834 = vmul.f32 %v770, %v550
        %v835 = vmul.f32 %v771, %v552
        %v836 = vmul.f32 %v772, %v556
        %v837 = vmul.f32 %v773, %v558
        %v838 = vmul.f32 %v774, %v560
        %v839 = vmul.f32 %v775, %v562
        %v840 = vmul.f32 %v776, %v566
        %v841 = vmul.f32 %v777, %v568
        %v842 = vmul.f32 %v778, %v570
        %v843 = vmul.f32 %v779, %v572
        %v844 = vmul.f32 %v780, %v576
        %v845 = vmul.f32 %v781, %v578
        %v846 = vmul.f32 %v782, %v580
        %v847 = vmul.f32 %v783, %v582
        %v848 = vmul.f32 %v784, %v586
        %v849 = vmul.f32 %v785, %v588
        %v850 = vmul.f32 %v786, %v590
        %v851 = vmul.f32 %v787, %v592
        %v852 = vmul.f32 %v788, %v596
        %v853 = vmul.f32 %v789, %v598
        %v854 = vmul.f32 %v790, %v600
        %v855 = vmul.f32 %v791, %v602
        %v856 = vmul.f32 %v792, %v606
        %v857 = vmul.f32 %v793, %v608
        %v858 = vmul.f32 %v794, %v610
        %v859 = vmul.f32 %v795, %v612
        %v860 = vmul.f32 %v796, %v616
        %v861 = vmul.f32 %v797, %v618
        %v862 = vmul.f32 %v798, %v620
        %v863 = vmul.f32 %v799, %v622
        %v864 = vmul.f32 %v800, %v626
        %v865 = vmul.f32 %v801, %v628
        %v866 = vmul.f32 %v802, %v630
        %v867 = vmul.f32 %v803, %v632
        %v868 = vmul.f32 %v804, %v636
        %v869 = vmul.f32 %v805, %v638
        %v870 = vmul.f32 %v806, %v640
        %v871 = vmul.f32 %v807, %v642
        %v872 = vmul.f32 %v808, %v646
        %v873 = vmul.f32 %v809, %v648
        %v874 = vmul.f32 %v810, %v650
        %v875 = vmul.f32 %v811, %v652
        %v876 = vmul.f32 %v812, %v656
        %v877 = vmul.f32 %v813, %v658
        %v878 = vmul.f32 %v814, %v660
        %v879 = vmul.f32 %v815, %v662
        %v880 = vmul.f32 %v816, %v666
        %v881 = vmul.f32 %v817, %v668
        %v882 = vmul.f32 %v818, %v670
        %v883 = vmul.f32 %v819, %v672
        %v884 = vmul.f32 %v820, %v676
        %v885 = vmul.f32 %v821, %v678
        %v886 = vmul.f32 %v822, %v680
        %v887 = vmul.f32 %v823, %v682
        %v888 = vmul.f32 %v824, %v686
        %v889 = vmul.f32 %v825, %v688
        %v890 = vmul.f32 %v826, %v690
        %v891 = vmul.f32 %v827, %v692
        %v892 = vmul.f32 %v828, %v696
        %v893 = vmul.f32 %v829, %v698
        %v894 = vmul.f32 %v830, %v700
        %v895 = vmul.f32 %v831, %v702
        %v896 = vmul.f32 %v832, %v546
        %v897 = vmul.f32 %v833, %v548
        %v898 = vmul.f32 %v834, %v550
        %v899 = vmul.f32 %v835, %v552
        %v900 = vmul.f32 %v836, %v556
        %v901 = vmul.f32 %v837, %v558
        %v902 = vmul.f32 %v838, %v560
        %v903 = vmul.f32 %v839, %v562
        %v904 = vmul.f32 %v840, %v566
        %v905 = vmul.f32 %v841, %v568
        %v906 = vmul.f32 %v842, %v570
        %v907 = vmul.f32 %v843, %v572
        %v908 = vmul.f32 %v844, %v576
        %v909 = vmul.f32 %v845, %v578
        %v910 = vmul.f32 %v846, %v580
        %v911 = vmul.f32 %v847, %v582
        %v912 = vmul.f32 %v848, %v586
        %v913 = vmul.f32 %v849, %v588
        %v914 = vmul.f32 %v850, %v590
        %v915 = vmul.f32 %v851, %v592
        %v916 = vmul.f32 %v852, %v596
        %v917 = vmul.f32 %v853, %v598
        %v918 = vmul.f32 %v854, %v600
        %v919 = vmul.f32 %v855, %v602
        %v920 = vmul.f32 %v856, %v606
        %v921 = vmul.f32 %v857, %v608
        %v922 = vmul.f32 %v858, %v610
        %v923 = vmul.f32 %v859, %v612
        %v924 = vmul.f32 %v860, %v616
        %v925 = vmul.f32 %v861, %v618
        %v926 = vmul.f32 %v862, %v620
        %v927 = vmul.f32 %v863, %v622
        %v928 = vmul.f32 %v864, %v626
        %v929 = vmul.f32 %v865, %v628
        %v930 = vmul.f32 %v866, %v630
        %v931 = vmul.f32 %v867, %v632
        %v932 = vmul.f32 %v868, %v636
        %v933 = vmul.f32 %v869, %v638
        %v934 = vmul.f32 %v870, %v640
        %v935 = vmul.f32 %v871, %v642
        %v936 = vmul.f32 %v872, %v646
        %v937 = vmul.f32 %v873, %v648
        %v938 = vmul.f32 %v874, %v650
        %v939 = vmul.f32 %v875, %v652
        %v940 = vmul.f32 %v876, %v656
        %v941 = vmul.f32 %v877, %v658
        %v942 = vmul.f32 %v878, %v660
        %v943 = vmul.f32 %v879, %v662
        %v944 = vmul.f32 %v880, %v666
        %v945 = vmul.f32 %v881, %v668
        %v946 = vmul.f32 %v882, %v670
        %v947 = vmul.f32 %v883, %v672
        %v948 = vmul.f32 %v884, %v676
        %v949 = vmul.f32 %v885, %v678
        %v950 = vmul.f32 %v886, %v680
        %v951 = vmul.f32 %v887, %v682
        %v952 = vmul.f32 %v888, %v686
        %v953 = vmul.f32 %v889, %v688
        %v954 = vmul.f32 %v890, %v690
        %v955 = vmul.f32 %v891, %v692
        %v956 = vmul.f32 %v892, %v696
        %v957 = vmul.f32 %v893, %v698
        %v958 = vmul.f32 %v894, %v700
        %v959 = vmul.f32 %v895, %v702
        %v960 = vadd.f32 %v546, %v896
        %v961 = vadd.f32 %v548, %v897
        %v962 = vadd.f32 %v550, %v898
        %v963 = vadd.f32 %v552, %v899
        %v964 = vadd.f32 %v556, %v900
        %v965 = vadd.f32 %v558, %v901
        %v966 = vadd.f32 %v560, %v902
        %v967 = vadd.f32 %v562, %v903
        %v968 = vadd.f32 %v566, %v904
        %v969 = vadd.f32 %v568, %v905
        %v970 = vadd.f32 %v570, %v906
        %v971 = vadd.f32 %v572, %v907
        %v972 = vadd.f32 %v576, %v908
        %v973 = vadd.f32 %v578, %v909
        %v974 = vadd.f32 %v580, %v910
        %v975 = vadd.f32 %v582, %v911
        %v976 = vadd.f32 %v586, %v912
        %v977 = vadd.f32 %v588, %v913
        %v978 = vadd.f32 %v590, %v914
        %v979 = vadd.f32 %v592, %v915
        %v980 = vadd.f32 %v596, %v916
        %v981 = vadd.f32 %v598, %v917
        %v982 = vadd.f32 %v600, %v918
        %v983 = vadd.f32 %v602, %v919
        %v984 = vadd.f32 %v606, %v920
        %v985 = vadd.f32 %v608, %v921
        %v986 = vadd.f32 %v610, %v922
        %v987 = vadd.f32 %v612, %v923
        %v988 = vadd.f32 %v616, %v924
        %v989 = vadd.f32 %v618, %v925
        %v990 = vadd.f32 %v620, %v926
        %v991 = vadd.f32 %v622, %v927
        %v992 = vadd.f32 %v626, %v928
        %v993 = vadd.f32 %v628, %v929
        %v994 = vadd.f32 %v630, %v930
        %v995 = vadd.f32 %v632, %v931
        %v996 = vadd.f32 %v636, %v932
        %v997 = vadd.f32 %v638, %v933
        %v998 = vadd.f32 %v640, %v934
        %v999 = vadd.f32 %v642, %v935
        %v1000 = vadd.f32 %v646, %v936
        %v1001 = vadd.f32 %v648, %v937
        %v1002 = vadd.f32 %v650, %v938
        %v1003 = vadd.f32 %v652, %v939
        %v1004 = vadd.f32 %v656, %v940
        %v1005 = vadd.f32 %v658, %v941
        %v1006 = vadd.f32 %v660, %v942
        %v1007 = vadd.f32 %v662, %v943
        %v1008 = vadd.f32 %v666, %v944
        %v1009 = vadd.f32 %v668, %v945
        %v1010 = vadd.f32 %v670, %v946
        %v1011 = vadd.f32 %v672, %v947
        %v1012 = vadd.f32 %v676, %v948
        %v1013 = vadd.f32 %v678, %v949
        %v1014 = vadd.f32 %v680, %v950
        %v1015 = vadd.f32 %v682, %v951
        %v1016 = vadd.f32 %v686, %v952
        %v1017 = vadd.f32 %v688, %v953
        %v1018 = vadd.f32 %v690, %v954
        %v1019 = vadd.f32 %v692, %v955
        %v1020 = vadd.f32 %v696, %v956
        %v1021 = vadd.f32 %v698, %v957
        %v1022 = vadd.f32 %v700, %v958
        %v1023 = vadd.f32 %v702, %v959
        %v1024 = vmul.f32 %v960, 0.7978846
        %v1025 = vmul.f32 %v961, 0.7978846
        %v1026 = vmul.f32 %v962, 0.7978846
        %v1027 = vmul.f32 %v963, 0.7978846
        %v1028 = vmul.f32 %v964, 0.7978846
        %v1029 = vmul.f32 %v965, 0.7978846
        %v1030 = vmul.f32 %v966, 0.7978846
        %v1031 = vmul.f32 %v967, 0.7978846
        %v1032 = vmul.f32 %v968, 0.7978846
        %v1033 = vmul.f32 %v969, 0.7978846
        %v1034 = vmul.f32 %v970, 0.7978846
        %v1035 = vmul.f32 %v971, 0.7978846
        %v1036 = vmul.f32 %v972, 0.7978846
        %v1037 = vmul.f32 %v973, 0.7978846
        %v1038 = vmul.f32 %v974, 0.7978846
        %v1039 = vmul.f32 %v975, 0.7978846
        %v1040 = vmul.f32 %v976, 0.7978846
        %v1041 = vmul.f32 %v977, 0.7978846
        %v1042 = vmul.f32 %v978, 0.7978846
        %v1043 = vmul.f32 %v979, 0.7978846
        %v1044 = vmul.f32 %v980, 0.7978846
        %v1045 = vmul.f32 %v981, 0.7978846
        %v1046 = vmul.f32 %v982, 0.7978846
        %v1047 = vmul.f32 %v983, 0.7978846
        %v1048 = vmul.f32 %v984, 0.7978846
        %v1049 = vmul.f32 %v985, 0.7978846
        %v1050 = vmul.f32 %v986, 0.7978846
        %v1051 = vmul.f32 %v987, 0.7978846
        %v1052 = vmul.f32 %v988, 0.7978846
        %v1053 = vmul.f32 %v989, 0.7978846
        %v1054 = vmul.f32 %v990, 0.7978846
        %v1055 = vmul.f32 %v991, 0.7978846
        %v1056 = vmul.f32 %v992, 0.7978846
        %v1057 = vmul.f32 %v993, 0.7978846
        %v1058 = vmul.f32 %v994, 0.7978846
        %v1059 = vmul.f32 %v995, 0.7978846
        %v1060 = vmul.f32 %v996, 0.7978846
        %v1061 = vmul.f32 %v997, 0.7978846
        %v1062 = vmul.f32 %v998, 0.7978846
        %v1063 = vmul.f32 %v999, 0.7978846
        %v1064 = vmul.f32 %v1000, 0.7978846
        %v1065 = vmul.f32 %v1001, 0.7978846
        %v1066 = vmul.f32 %v1002, 0.7978846
        %v1067 = vmul.f32 %v1003, 0.7978846
        %v1068 = vmul.f32 %v1004, 0.7978846
        %v1069 = vmul.f32 %v1005, 0.7978846
        %v1070 = vmul.f32 %v1006, 0.7978846
        %v1071 = vmul.f32 %v1007, 0.7978846
        %v1072 = vmul.f32 %v1008, 0.7978846
        %v1073 = vmul.f32 %v1009, 0.7978846
        %v1074 = vmul.f32 %v1010, 0.7978846
        %v1075 = vmul.f32 %v1011, 0.7978846
        %v1076 = vmul.f32 %v1012, 0.7978846
        %v1077 = vmul.f32 %v1013, 0.7978846
        %v1078 = vmul.f32 %v1014, 0.7978846
        %v1079 = vmul.f32 %v1015, 0.7978846
        %v1080 = vmul.f32 %v1016, 0.7978846
        %v1081 = vmul.f32 %v1017, 0.7978846
        %v1082 = vmul.f32 %v1018, 0.7978846
        %v1083 = vmul.f32 %v1019, 0.7978846
        %v1084 = vmul.f32 %v1020, 0.7978846
        %v1085 = vmul.f32 %v1021, 0.7978846
        %v1086 = vmul.f32 %v1022, 0.7978846
        %v1087 = vmul.f32 %v1023, 0.7978846
        %v1088 = vtanh.pop %v1024
        %v1089 = vtanh.pop %v1025
        %v1090 = vtanh.pop %v1026
        %v1091 = vtanh.pop %v1027
        %v1092 = vtanh.pop %v1028
        %v1093 = vtanh.pop %v1029
        %v1094 = vtanh.pop %v1030
        %v1095 = vtanh.pop %v1031
        %v1096 = vtanh.pop %v1032
        %v1097 = vtanh.pop %v1033
        %v1098 = vtanh.pop %v1034
        %v1099 = vtanh.pop %v1035
        %v1100 = vtanh.pop %v1036
        %v1101 = vtanh.pop %v1037
        %v1102 = vtanh.pop %v1038
        %v1103 = vtanh.pop %v1039
        %v1104 = vtanh.pop %v1040
        %v1105 = vtanh.pop %v1041
        %v1106 = vtanh.pop %v1042
        %v1107 = vtanh.pop %v1043
        %v1108 = vtanh.pop %v1044
        %v1109 = vtanh.pop %v1045
        %v1110 = vtanh.pop %v1046
        %v1111 = vtanh.pop %v1047
        %v1112 = vtanh.pop %v1048
        %v1113 = vtanh.pop %v1049
        %v1114 = vtanh.pop %v1050
        %v1115 = vtanh.pop %v1051
        %v1116 = vtanh.pop %v1052
        %v1117 = vtanh.pop %v1053
        %v1118 = vtanh.pop %v1054
        %v1119 = vtanh.pop %v1055
        %v1120 = vtanh.pop %v1056
        %v1121 = vtanh.pop %v1057
        %v1122 = vtanh.pop %v1058
        %v1123 = vtanh.pop %v1059
        %v1124 = vtanh.pop %v1060
        %v1125 = vtanh.pop %v1061
        %v1126 = vtanh.pop %v1062
        %v1127 = vtanh.pop %v1063
        %v1128 = vtanh.pop %v1064
        %v1129 = vtanh.pop %v1065
        %v1130 = vtanh.pop %v1066
        %v1131 = vtanh.pop %v1067
        %v1132 = vtanh.pop %v1068
        %v1133 = vtanh.pop %v1069
        %v1134 = vtanh.pop %v1070
        %v1135 = vtanh.pop %v1071
        %v1136 = vtanh.pop %v1072
        %v1137 = vtanh.pop %v1073
        %v1138 = vtanh.pop %v1074
        %v1139 = vtanh.pop %v1075
        %v1140 = vtanh.pop %v1076
        %v1141 = vtanh.pop %v1077
        %v1142 = vtanh.pop %v1078
        %v1143 = vtanh.pop %v1079
        %v1144 = vtanh.pop %v1080
        %v1145 = vtanh.pop %v1081
        %v1146 = vtanh.pop %v1082
        %v1147 = vtanh.pop %v1083
        %v1148 = vtanh.pop %v1084
        %v1149 = vtanh.pop %v1085
        %v1150 = vtanh.pop %v1086
        %v1151 = vtanh.pop %v1087
        %v1152 = vadd.f32 %v1088, 1.0
        %v1153 = vadd.f32 %v1089, 1.0
        %v1154 = vadd.f32 %v1090, 1.0
        %v1155 = vadd.f32 %v1091, 1.0
        %v1156 = vadd.f32 %v1092, 1.0
        %v1157 = vadd.f32 %v1093, 1.0
        %v1158 = vadd.f32 %v1094, 1.0
        %v1159 = vadd.f32 %v1095, 1.0
        %v1160 = vadd.f32 %v1096, 1.0
        %v1161 = vadd.f32 %v1097, 1.0
        %v1162 = vadd.f32 %v1098, 1.0
        %v1163 = vadd.f32 %v1099, 1.0
        %v1164 = vadd.f32 %v1100, 1.0
        %v1165 = vadd.f32 %v1101, 1.0
        %v1166 = vadd.f32 %v1102, 1.0
        %v1167 = vadd.f32 %v1103, 1.0
        %v1168 = vadd.f32 %v1104, 1.0
        %v1169 = vadd.f32 %v1105, 1.0
        %v1170 = vadd.f32 %v1106, 1.0
        %v1171 = vadd.f32 %v1107, 1.0
        %v1172 = vadd.f32 %v1108, 1.0
        %v1173 = vadd.f32 %v1109, 1.0
        %v1174 = vadd.f32 %v1110, 1.0
        %v1175 = vadd.f32 %v1111, 1.0
        %v1176 = vadd.f32 %v1112, 1.0
        %v1177 = vadd.f32 %v1113, 1.0
        %v1178 = vadd.f32 %v1114, 1.0
        %v1179 = vadd.f32 %v1115, 1.0
        %v1180 = vadd.f32 %v1116, 1.0
        %v1181 = vadd.f32 %v1117, 1.0
        %v1182 = vadd.f32 %v1118, 1.0
        %v1183 = vadd.f32 %v1119, 1.0
        %v1184 = vadd.f32 %v1120, 1.0
        %v1185 = vadd.f32 %v1121, 1.0
        %v1186 = vadd.f32 %v1122, 1.0
        %v1187 = vadd.f32 %v1123, 1.0
        %v1188 = vadd.f32 %v1124, 1.0
        %v1189 = vadd.f32 %v1125, 1.0
        %v1190 = vadd.f32 %v1126, 1.0
        %v1191 = vadd.f32 %v1127, 1.0
        %v1192 = vadd.f32 %v1128, 1.0
        %v1193 = vadd.f32 %v1129, 1.0
        %v1194 = vadd.f32 %v1130, 1.0
        %v1195 = vadd.f32 %v1131, 1.0
        %v1196 = vadd.f32 %v1132, 1.0
        %v1197 = vadd.f32 %v1133, 1.0
        %v1198 = vadd.f32 %v1134, 1.0
        %v1199 = vadd.f32 %v1135, 1.0
        %v1200 = vadd.f32 %v1136, 1.0
        %v1201 = vadd.f32 %v1137, 1.0
        %v1202 = vadd.f32 %v1138, 1.0
        %v1203 = vadd.f32 %v1139, 1.0
        %v1204 = vadd.f32 %v1140, 1.0
        %v1205 = vadd.f32 %v1141, 1.0
        %v1206 = vadd.f32 %v1142, 1.0
        %v1207 = vadd.f32 %v1143, 1.0
        %v1208 = vadd.f32 %v1144, 1.0
        %v1209 = vadd.f32 %v1145, 1.0
        %v1210 = vadd.f32 %v1146, 1.0
        %v1211 = vadd.f32 %v1147, 1.0
        %v1212 = vadd.f32 %v1148, 1.0
        %v1213 = vadd.f32 %v1149, 1.0
        %v1214 = vadd.f32 %v1150, 1.0
        %v1215 = vadd.f32 %v1151, 1.0
        %v1216 = vmul.f32 %v704, %v1152
        %v1217 = vmul.f32 %v705, %v1153
        %v1218 = vmul.f32 %v706, %v1154
        %v1219 = vmul.f32 %v707, %v1155
        %v1220 = vmul.f32 %v708, %v1156
        %v1221 = vmul.f32 %v709, %v1157
        %v1222 = vmul.f32 %v710, %v1158
        %v1223 = vmul.f32 %v711, %v1159
        %v1224 = vmul.f32 %v712, %v1160
        %v1225 = vmul.f32 %v713, %v1161
        %v1226 = vmul.f32 %v714, %v1162
        %v1227 = vmul.f32 %v715, %v1163
        %v1228 = vmul.f32 %v716, %v1164
        %v1229 = vmul.f32 %v717, %v1165
        %v1230 = vmul.f32 %v718, %v1166
        %v1231 = vmul.f32 %v719, %v1167
        %v1232 = vmul.f32 %v720, %v1168
        %v1233 = vmul.f32 %v721, %v1169
        %v1234 = vmul.f32 %v722, %v1170
        %v1235 = vmul.f32 %v723, %v1171
        %v1236 = vmul.f32 %v724, %v1172
        %v1237 = vmul.f32 %v725, %v1173
        %v1238 = vmul.f32 %v726, %v1174
        %v1239 = vmul.f32 %v727, %v1175
        %v1240 = vmul.f32 %v728, %v1176
        %v1241 = vmul.f32 %v729, %v1177
        %v1242 = vmul.f32 %v730, %v1178
        %v1243 = vmul.f32 %v731, %v1179
        %v1244 = vmul.f32 %v732, %v1180
        %v1245 = vmul.f32 %v733, %v1181
        %v1246 = vmul.f32 %v734, %v1182
        %v1247 = vmul.f32 %v735, %v1183
        %v1248 = vmul.f32 %v736, %v1184
        %v1249 = vmul.f32 %v737, %v1185
        %v1250 = vmul.f32 %v738, %v1186
        %v1251 = vmul.f32 %v739, %v1187
        %v1252 = vmul.f32 %v740, %v1188
        %v1253 = vmul.f32 %v741, %v1189
        %v1254 = vmul.f32 %v742, %v1190
        %v1255 = vmul.f32 %v743, %v1191
        %v1256 = vmul.f32 %v744, %v1192
        %v1257 = vmul.f32 %v745, %v1193
        %v1258 = vmul.f32 %v746, %v1194
        %v1259 = vmul.f32 %v747, %v1195
        %v1260 = vmul.f32 %v748, %v1196
        %v1261 = vmul.f32 %v749, %v1197
        %v1262 = vmul.f32 %v750, %v1198
        %v1263 = vmul.f32 %v751, %v1199
        %v1264 = vmul.f32 %v752, %v1200
        %v1265 = vmul.f32 %v753, %v1201
        %v1266 = vmul.f32 %v754, %v1202
        %v1267 = vmul.f32 %v755, %v1203
        %v1268 = vmul.f32 %v756, %v1204
        %v1269 = vmul.f32 %v757, %v1205
        %v1270 = vmul.f32 %v758, %v1206
        %v1271 = vmul.f32 %v759, %v1207
        %v1272 = vmul.f32 %v760, %v1208
        %v1273 = vmul.f32 %v761, %v1209
        %v1274 = vmul.f32 %v762, %v1210
        %v1275 = vmul.f32 %v763, %v1211
        %v1276 = vmul.f32 %v764, %v1212
        %v1277 = vmul.f32 %v765, %v1213
        %v1278 = vmul.f32 %v766, %v1214
        %v1279 = vmul.f32 %v767, %v1215
        %v1280 = vpack.c.bf16 %v1218, %v1216
        %v1281 = vpack.c.bf16 %v1219, %v1217
        %v1282 = vpack.c.bf16 %v1222, %v1220
        %v1283 = vpack.c.bf16 %v1223, %v1221
        %v1284 = vpack.c.bf16 %v1226, %v1224
        %v1285 = vpack.c.bf16 %v1227, %v1225
        %v1286 = vpack.c.bf16 %v1230, %v1228
        %v1287 = vpack.c.bf16 %v1231, %v1229
        %v1288 = vpack.c.bf16 %v1234, %v1232
        %v1289 = vpack.c.bf16 %v1235, %v1233
        %v1290 = vpack.c.bf16 %v1238, %v1236
        %v1291 = vpack.c.bf16 %v1239, %v1237
        %v1292 = vpack.c.bf16 %v1242, %v1240
        %v1293 = vpack.c.bf16 %v1243, %v1241
        %v1294 = vpack.c.bf16 %v1246, %v1244
        %v1295 = vpack.c.bf16 %v1247, %v1245
        %v1296 = vpack.c.bf16 %v1250, %v1248
        %v1297 = vpack.c.bf16 %v1251, %v1249
        %v1298 = vpack.c.bf16 %v1254, %v1252
        %v1299 = vpack.c.bf16 %v1255, %v1253
        %v1300 = vpack.c.bf16 %v1258, %v1256
        %v1301 = vpack.c.bf16 %v1259, %v1257
        %v1302 = vpack.c.bf16 %v1262, %v1260
        %v1303 = vpack.c.bf16 %v1263, %v1261
        %v1304 = vpack.c.bf16 %v1266, %v1264
        %v1305 = vpack.c.bf16 %v1267, %v1265
        %v1306 = vpack.c.bf16 %v1270, %v1268
        %v1307 = vpack.c.bf16 %v1271, %v1269
        %v1308 = vpack.c.bf16 %v1274, %v1272
        %v1309 = vpack.c.bf16 %v1275, %v1273
        %v1310 = vpack.c.bf16 %v1278, %v1276
        %v1311 = vpack.c.bf16 %v1279, %v1277
        %v1312 = vld [vmem:[#allocation7] sm:$0xf]
        %v1313 = vld [vmem:[#allocation7 + $0x4] sm:$0xf]
        %v1314 = vld [vmem:[#allocation7 + $0x8] sm:$0xf]
        %v1315 = vld [vmem:[#allocation7 + $0xc] sm:$0xf]
        %v1316 = vld [vmem:[#allocation7 + $0x10] sm:$0xf]
        %v1317 = vld [vmem:[#allocation7 + $0x14] sm:$0xf]
        %v1318 = vld [vmem:[#allocation7 + $0x18] sm:$0xf]
        %v1319 = vld [vmem:[#allocation7 + $0x1c] sm:$0xf]
        %v1320 = vld [vmem:[#allocation7 + $0x20] sm:$0xf]
        %v1321 = vld [vmem:[#allocation7 + $0x24] sm:$0xf]
        %v1322 = vld [vmem:[#allocation7 + $0x28] sm:$0xf]
        %v1323 = vld [vmem:[#allocation7 + $0x2c] sm:$0xf]
        %v1324 = vld [vmem:[#allocation7 + $0x30] sm:$0xf]
        %v1325 = vld [vmem:[#allocation7 + $0x34] sm:$0xf]
        %v1326 = vld [vmem:[#allocation7 + $0x38] sm:$0xf]
        %v1327 = vld [vmem:[#allocation7 + $0x3c] sm:$0xf]
        %v1328 = vld [vmem:[#allocation7 + $0x40] sm:$0xf]
        %v1329 = vld [vmem:[#allocation7 + $0x44] sm:$0xf]
        %v1330 = vld [vmem:[#allocation7 + $0x48] sm:$0xf]
        %v1331 = vld [vmem:[#allocation7 + $0x4c] sm:$0xf]
        %v1332 = vld [vmem:[#allocation7 + $0x50] sm:$0xf]
        %v1333 = vld [vmem:[#allocation7 + $0x54] sm:$0xf]
        %v1334 = vld [vmem:[#allocation7 + $0x58] sm:$0xf]
        %v1335 = vld [vmem:[#allocation7 + $0x5c] sm:$0xf]
        %v1336 = vld [vmem:[#allocation7 + $0x60] sm:$0xf]
        %v1337 = vld [vmem:[#allocation7 + $0x64] sm:$0xf]
        %v1338 = vld [vmem:[#allocation7 + $0x68] sm:$0xf]
        %v1339 = vld [vmem:[#allocation7 + $0x6c] sm:$0xf]
        %v1340 = vld [vmem:[#allocation7 + $0x70] sm:$0xf]
        %v1341 = vld [vmem:[#allocation7 + $0x74] sm:$0xf]
        %v1342 = vld [vmem:[#allocation7 + $0x78] sm:$0xf]
        %v1343 = vld [vmem:[#allocation7 + $0x7c] sm:$0xf]
        %v1344 = vld [vmem:[%s4] sm:$0x1]
        %v1346 = vlaneseq
        %v1347 = vshrl.u32 %v1346, 7
        %v1348 = vsub.s32 0, %v1347
        %v1349 = vrot.slane %v1344, %v1348
        %v1383 = vunpack.c.l.b16 %v1312
        %v1384 = vunpack.c.l.b16 %v1313
        %v1385 = vunpack.c.l.b16 %v1314
        %v1386 = vunpack.c.l.b16 %v1315
        %v1387 = vunpack.c.l.b16 %v1316
        %v1388 = vunpack.c.l.b16 %v1317
        %v1389 = vunpack.c.l.b16 %v1318
        %v1390 = vunpack.c.l.b16 %v1319
        %v1391 = vunpack.c.l.b16 %v1320
        %v1392 = vunpack.c.l.b16 %v1321
        %v1393 = vunpack.c.l.b16 %v1322
        %v1394 = vunpack.c.l.b16 %v1323
        %v1395 = vunpack.c.l.b16 %v1324
        %v1396 = vunpack.c.l.b16 %v1325
        %v1397 = vunpack.c.l.b16 %v1326
        %v1398 = vunpack.c.l.b16 %v1327
        %v1399 = vunpack.c.l.b16 %v1328
        %v1400 = vunpack.c.l.b16 %v1329
        %v1401 = vunpack.c.l.b16 %v1330
        %v1402 = vunpack.c.l.b16 %v1331
        %v1403 = vunpack.c.l.b16 %v1332
        %v1404 = vunpack.c.l.b16 %v1333
        %v1405 = vunpack.c.l.b16 %v1334
        %v1406 = vunpack.c.l.b16 %v1335
        %v1407 = vunpack.c.l.b16 %v1336
        %v1408 = vunpack.c.l.b16 %v1337
        %v1409 = vunpack.c.l.b16 %v1338
        %v1410 = vunpack.c.l.b16 %v1339
        %v1411 = vunpack.c.l.b16 %v1340
        %v1412 = vunpack.c.l.b16 %v1341
        %v1413 = vunpack.c.l.b16 %v1342
        %v1414 = vunpack.c.l.b16 %v1343
        %v1415 = vpack.c.b16 %v1384, %v1383
        %v1416 = vpack.c.b16 %v1386, %v1385
        %v1417 = vpack.c.b16 %v1388, %v1387
        %v1418 = vpack.c.b16 %v1390, %v1389
        %v1419 = vpack.c.b16 %v1392, %v1391
        %v1420 = vpack.c.b16 %v1394, %v1393
        %v1421 = vpack.c.b16 %v1396, %v1395
        %v1422 = vpack.c.b16 %v1398, %v1397
        %v1423 = vpack.c.b16 %v1400, %v1399
        %v1424 = vpack.c.b16 %v1402, %v1401
        %v1425 = vpack.c.b16 %v1404, %v1403
        %v1426 = vpack.c.b16 %v1406, %v1405
        %v1427 = vpack.c.b16 %v1408, %v1407
        %v1428 = vpack.c.b16 %v1410, %v1409
        %v1429 = vpack.c.b16 %v1412, %v1411
        %v1430 = vpack.c.b16 %v1414, %v1413
        %1447 = vmatprep.subr.bf16.mxu0 0
        %1448 = vmatpush1.bf16.msra.mxu0 %v1415
        %1449 = vmatprep.subr.bf16.mxu0 0
        %1450 = vmatpush1.bf16.msra.mxu0 %v1416
        %1451 = vmatprep.subr.bf16.mxu0 0
        %1452 = vmatpush1.bf16.msra.mxu0 %v1417
        %1453 = vmatprep.subr.bf16.mxu0 0
        %1454 = vmatpush1.bf16.msra.mxu0 %v1418
        %1455 = vmatprep.subr.bf16.mxu0 0
        %1456 = vmatpush1.bf16.msra.mxu0 %v1419
        %1457 = vmatprep.subr.bf16.mxu0 0
        %1458 = vmatpush1.bf16.msra.mxu0 %v1420
        %1459 = vmatprep.subr.bf16.mxu0 0
        %1460 = vmatpush1.bf16.msra.mxu0 %v1421
        %1461 = vmatprep.subr.bf16.mxu0 0
        %1462 = vmatpush1.bf16.msra.mxu0 %v1422
        %1463 = vmatprep.subr.bf16.mxu0 0
        %1464 = vmatpush1.bf16.msra.mxu0 %v1423
        %1465 = vmatprep.subr.bf16.mxu0 0
        %1466 = vmatpush1.bf16.msra.mxu0 %v1424
        %1467 = vmatprep.subr.bf16.mxu0 0
        %1468 = vmatpush1.bf16.msra.mxu0 %v1425
        %1469 = vmatprep.subr.bf16.mxu0 0
        %1470 = vmatpush1.bf16.msra.mxu0 %v1426
        %1471 = vmatprep.subr.bf16.mxu0 0
        %1472 = vmatpush1.bf16.msra.mxu0 %v1427
        %1473 = vmatprep.subr.bf16.mxu0 0
        %1474 = vmatpush1.bf16.msra.mxu0 %v1428
        %1475 = vmatprep.subr.bf16.mxu0 0
        %1476 = vmatpush1.bf16.msra.mxu0 %v1429
        %1477 = vmatprep.subr.bf16.mxu0 0
        %1478 = vmatpush1.bf16.msra.mxu0 %v1430
        %1479 = vmatprep.mubr.bf16.mxu0 %v1281
        %1480 = vmatmul.mubr.bf16.gmra.mrb[0].mxu0 %v1280
        %v1481 = vpop.f32.mrb[0].mxu0
        %v1482 = vadd.f32 %v1349, %v1481
        %v1483 = vpop.f32.mrb[0].mxu0
        %v1484 = vpop.f32.mrb[0].mxu0
        %v1485 = vadd.f32 %v1349, %v1484
        %v1486 = vpop.f32.mrb[0].mxu0
        %1487 = vmatprep.mubr.bf16.mxu0 %v1283
        %1488 = vmatmul.mubr.bf16.gmra.mrb[0].mxu0 %v1282
        %v1489 = vpop.f32.mrb[0].mxu0
        %v1490 = vadd.f32 %v1349, %v1489
        %v1491 = vpop.f32.mrb[0].mxu0
        %v1492 = vpop.f32.mrb[0].mxu0
        %v1493 = vadd.f32 %v1349, %v1492
        %v1494 = vpop.f32.mrb[0].mxu0
        %1495 = vmatprep.mubr.bf16.mxu0 %v1285
        %1496 = vmatmul.mubr.bf16.gmra.mrb[0].mxu0 %v1284
        %v1497 = vpop.f32.mrb[0].mxu0
        %v1498 = vadd.f32 %v1349, %v1497
        %v1499 = vpop.f32.mrb[0].mxu0
        %v1500 = vpop.f32.mrb[0].mxu0
        %v1501 = vadd.f32 %v1349, %v1500
        %v1502 = vpop.f32.mrb[0].mxu0
        %1503 = vmatprep.mubr.bf16.mxu0 %v1287
        %1504 = vmatmul.mubr.bf16.gmra.mrb[0].mxu0 %v1286
        %v1505 = vpop.f32.mrb[0].mxu0
        %v1506 = vadd.f32 %v1349, %v1505
        %v1507 = vpop.f32.mrb[0].mxu0
        %v1508 = vpop.f32.mrb[0].mxu0
        %v1509 = vadd.f32 %v1349, %v1508
        %v1510 = vpop.f32.mrb[0].mxu0
        %1511 = vmatprep.mubr.bf16.mxu0 %v1289
        %1512 = vmatmul.mubr.bf16.gmra.mrb[0].mxu0 %v1288
        %v1513 = vpop.f32.mrb[0].mxu0
        %v1514 = vadd.f32 %v1349, %v1513
        %v1515 = vpop.f32.mrb[0].mxu0
        %v1516 = vpop.f32.mrb[0].mxu0
        %v1517 = vadd.f32 %v1349, %v1516
        %v1518 = vpop.f32.mrb[0].mxu0
        %1519 = vmatprep.mubr.bf16.mxu0 %v1291
        %1520 = vmatmul.mubr.bf16.gmra.mrb[0].mxu0 %v1290
        %v1521 = vpop.f32.mrb[0].mxu0
        %v1522 = vadd.f32 %v1349, %v1521
        %v1523 = vpop.f32.mrb[0].mxu0
        %v1524 = vpop.f32.mrb[0].mxu0
        %v1525 = vadd.f32 %v1349, %v1524
        %v1526 = vpop.f32.mrb[0].mxu0
        %1527 = vmatprep.mubr.bf16.mxu0 %v1293
        %1528 = vmatmul.mubr.bf16.gmra.mrb[0].mxu0 %v1292
        %v1529 = vpop.f32.mrb[0].mxu0
        %v1530 = vadd.f32 %v1349, %v1529
        %v1531 = vpop.f32.mrb[0].mxu0
        %v1532 = vpop.f32.mrb[0].mxu0
        %v1533 = vadd.f32 %v1349, %v1532
        %v1534 = vpop.f32.mrb[0].mxu0
        %1535 = vmatprep.mubr.bf16.mxu0 %v1295
        %1536 = vmatmul.mubr.bf16.gmra.mrb[0].mxu0 %v1294
        %v1537 = vpop.f32.mrb[0].mxu0
        %v1538 = vadd.f32 %v1349, %v1537
        %v1539 = vpop.f32.mrb[0].mxu0
        %v1540 = vpop.f32.mrb[0].mxu0
        %v1541 = vadd.f32 %v1349, %v1540
        %v1542 = vpop.f32.mrb[0].mxu0
        %1543 = vmatprep.mubr.bf16.mxu0 %v1297
        %1544 = vmatmul.mubr.bf16.gmra.mrb[0].mxu0 %v1296
        %v1545 = vpop.f32.mrb[0].mxu0
        %v1546 = vadd.f32 %v1349, %v1545
        %v1547 = vpop.f32.mrb[0].mxu0
        %v1548 = vpop.f32.mrb[0].mxu0
        %v1549 = vadd.f32 %v1349, %v1548
        %v1550 = vpop.f32.mrb[0].mxu0
        %1551 = vmatprep.mubr.bf16.mxu0 %v1299
        %1552 = vmatmul.mubr.bf16.gmra.mrb[0].mxu0 %v1298
        %v1553 = vpop.f32.mrb[0].mxu0
        %v1554 = vadd.f32 %v1349, %v1553
        %v1555 = vpop.f32.mrb[0].mxu0
        %v1556 = vpop.f32.mrb[0].mxu0
        %v1557 = vadd.f32 %v1349, %v1556
        %v1558 = vpop.f32.mrb[0].mxu0
        %1559 = vmatprep.mubr.bf16.mxu0 %v1301
        %1560 = vmatmul.mubr.bf16.gmra.mrb[0].mxu0 %v1300
        %v1561 = vpop.f32.mrb[0].mxu0
        %v1562 = vadd.f32 %v1349, %v1561
        %v1563 = vpop.f32.mrb[0].mxu0
        %v1564 = vpop.f32.mrb[0].mxu0
        %v1565 = vadd.f32 %v1349, %v1564
        %v1566 = vpop.f32.mrb[0].mxu0
        %1567 = vmatprep.mubr.bf16.mxu0 %v1303
        %1568 = vmatmul.mubr.bf16.gmra.mrb[0].mxu0 %v1302
        %v1569 = vpop.f32.mrb[0].mxu0
        %v1570 = vadd.f32 %v1349, %v1569
        %v1571 = vpop.f32.mrb[0].mxu0
        %v1572 = vpop.f32.mrb[0].mxu0
        %v1573 = vadd.f32 %v1349, %v1572
        %v1574 = vpop.f32.mrb[0].mxu0
        %1575 = vmatprep.mubr.bf16.mxu0 %v1305
        %1576 = vmatmul.mubr.bf16.gmra.mrb[0].mxu0 %v1304
        %v1577 = vpop.f32.mrb[0].mxu0
        %v1578 = vadd.f32 %v1349, %v1577
        %v1579 = vpop.f32.mrb[0].mxu0
        %v1580 = vpop.f32.mrb[0].mxu0
        %v1581 = vadd.f32 %v1349, %v1580
        %v1582 = vpop.f32.mrb[0].mxu0
        %1583 = vmatprep.mubr.bf16.mxu0 %v1307
        %1584 = vmatmul.mubr.bf16.gmra.mrb[0].mxu0 %v1306
        %v1585 = vpop.f32.mrb[0].mxu0
        %v1586 = vadd.f32 %v1349, %v1585
        %v1587 = vpop.f32.mrb[0].mxu0
        %v1588 = vpop.f32.mrb[0].mxu0
        %v1589 = vadd.f32 %v1349, %v1588
        %v1590 = vpop.f32.mrb[0].mxu0
        %1591 = vmatprep.mubr.bf16.mxu0 %v1309
        %1592 = vmatmul.mubr.bf16.gmra.mrb[0].mxu0 %v1308
        %v1593 = vpop.f32.mrb[0].mxu0
        %v1594 = vadd.f32 %v1349, %v1593
        %v1595 = vpop.f32.mrb[0].mxu0
        %v1596 = vpop.f32.mrb[0].mxu0
        %v1597 = vadd.f32 %v1349, %v1596
        %v1598 = vpop.f32.mrb[0].mxu0
        %1599 = vmatprep.mubr.bf16.mxu0 %v1311
        %1600 = vmatmul.mubr.bf16.gmra.mrb[0].mxu0 %v1310
        %v1601 = vpop.f32.mrb[0].mxu0
        %v1602 = vadd.f32 %v1349, %v1601
        %v1603 = vpop.f32.mrb[0].mxu0
        %v1604 = vpop.f32.mrb[0].mxu0
        %v1605 = vadd.f32 %v1349, %v1604
        %v1606 = vpop.f32.mrb[0].mxu0
        %1607 = vdwg.mxu0
        %1608 = vst [vmem:[%s271] sm:$0xff] %v1482
        %1609 = vst [vmem:[%s271 + $0x8] sm:$0xff] %v1485
        %1610 = vst [vmem:[%s271 + $0x10] sm:$0xff] %v1490
        %1611 = vst [vmem:[%s271 + $0x18] sm:$0xff] %v1493
        %1612 = vst [vmem:[%s271 + $0x20] sm:$0xff] %v1498
        %1613 = vst [vmem:[%s271 + $0x28] sm:$0xff] %v1501
        %1614 = vst [vmem:[%s271 + $0x30] sm:$0xff] %v1506
        %1615 = vst [vmem:[%s271 + $0x38] sm:$0xff] %v1509
        %1616 = vst [vmem:[%s271 + $0x40] sm:$0xff] %v1514
        %1617 = vst [vmem:[%s271 + $0x48] sm:$0xff] %v1517
        %1618 = vst [vmem:[%s271 + $0x50] sm:$0xff] %v1522
        %1619 = vst [vmem:[%s271 + $0x58] sm:$0xff] %v1525
        %1620 = vst [vmem:[%s271 + $0x60] sm:$0xff] %v1530
        %1621 = vst [vmem:[%s271 + $0x68] sm:$0xff] %v1533
        %1622 = vst [vmem:[%s271 + $0x70] sm:$0xff] %v1538
        %1623 = vst [vmem:[%s271 + $0x78] sm:$0xff] %v1541
        %1624 = vst [vmem:[%s271 + $0x80] sm:$0xff] %v1546
        %1625 = vst [vmem:[%s271 + $0x88] sm:$0xff] %v1549
        %1626 = vst [vmem:[%s271 + $0x90] sm:$0xff] %v1554
        %1627 = vst [vmem:[%s271 + $0x98] sm:$0xff] %v1557
        %1628 = vst [vmem:[%s271 + $0xa0] sm:$0xff] %v1562
        %1629 = vst [vmem:[%s271 + $0xa8] sm:$0xff] %v1565
        %1630 = vst [vmem:[%s271 + $0xb0] sm:$0xff] %v1570
        %1631 = vst [vmem:[%s271 + $0xb8] sm:$0xff] %v1573
        %1632 = vst [vmem:[%s271 + $0xc0] sm:$0xff] %v1578
        %1633 = vst [vmem:[%s271 + $0xc8] sm:$0xff] %v1581
        %1634 = vst [vmem:[%s271 + $0xd0] sm:$0xff] %v1586
        %1635 = vst [vmem:[%s271 + $0xd8] sm:$0xff] %v1589
        %1636 = vst [vmem:[%s271 + $0xe0] sm:$0xff] %v1594
        %1637 = vst [vmem:[%s271 + $0xe8] sm:$0xff] %v1597
        %1638 = vst [vmem:[%s271 + $0xf0] sm:$0xff] %v1602
        %1639 = vst [vmem:[%s271 + $0xf8] sm:$0xff] %v1605
        %s1640 = sand.u32 %s141, 1
        %s1641 = scalar_lea.sflag [#allocation4], %s1640
        %s1642 = sand.u32 %s141, 1
        %s1643 = smul.addr %s1642, 256
        %s1644 = scalar_lea.vmem [#allocation8], %s1643
        // Predicated region
        $region53: #{tpu_custom_call.1} parent=39 // pred_check
          %p1645 = pneg %p151
        $region54: #{tpu_custom_call.1} parent=39 // pred_check_branch
          %1647 = sbr.rel (%p1645) target = $region56
        $region55: #{tpu_custom_call.1} parent=39 // pred_region
          %s1648 = smul.u32 32, %s23
          %s1650 = ssub.s32 4096, 4096
          %1651 = vsyncadd %s1641, %s1650
          %s1652 = smul.addr %s1648, 128
          %s1653 = scalar_lea.hbm %s5, %s1652
          %s1654 = sshll.u32 %s1644, 4
          %s1655 = int_to_ptr.vmem [resolvable:$true] %s1654
          %1660 = dma.vmem_to_hbm [thread:$0]  %s1655, 4096, %s1653, %s1641, 128, 128, 8
        $region56: #{tpu_custom_call.1} parent=39 // pred_fallthru
          _
      $region40: #{tpu_custom_call.1} parent=5 // pred_fallthru
        _
      %p1661 = scmp.le.s32.totalorder 2, %s18
      // Predicated region
      $region57: #{tpu_custom_call.1} parent=5 // pred_check
        %p1662 = pneg %p1661
      $region58: #{tpu_custom_call.1} parent=5 // pred_check_branch
        %1664 = sbr.rel (%p1662) target = $region60
      $region59: #{tpu_custom_call.1} parent=5 // pred_region
        %s1665 = ssub.s32 %s18, 2
        // Predicated region
        $region61: #{tpu_custom_call.1} parent=59 // pred_check
          %p1666 = pneg %p157
        $region62: #{tpu_custom_call.1} parent=59 // pred_check_branch
          %1668 = sbr.rel (%p1666) target = $region64
        $region63: #{tpu_custom_call.1} parent=59 // pred_region
          %s1669 = sand.u32 %s142, 1
          %s1670 = scalar_lea.sflag [#allocation4], %s1669
          %s1671 = sand.u32 %s142, 1
          %s1672 = smul.addr %s1671, 256
          %s1673 = scalar_lea.vmem [#allocation8], %s1672
          %1674 = dma.done %s1670, 4096
        $region64: #{tpu_custom_call.1} parent=59 // pred_fallthru
          _
      $region60: #{tpu_custom_call.1} parent=5 // pred_fallthru
        _
    $region6: #{tpu_custom_call.1} parent=1 // loop_footer
      %s22 = sadd.s32 1, %s18
    $region7: #{tpu_custom_call.1} parent=1 // loop_footer_branch
      %17 = sbr.rel target = $region3
    $region8: #{tpu_custom_call.1} parent=1 // loop_exit
      _
    %1675 = vsyncpa [#allocation3], 1
    %s1676 = scalar_lea.sflag [#allocation3], 1
    %1677 = vsyncpa %s1676, 1
    %1678 = vsyncpa [#allocation6], 1
    %1679 = vsyncpa [#allocation4], 1
    %s1680 = scalar_lea.sflag [#allocation4], 1
    %1681 = vsyncpa %s1680, 1

</llo_original>
